<compile_context>
chip_gen: v7x
topology: tpu7x:2x2x1
jax: 0.10.0
libtpu: 0.0.40
codegen_flags: <defaults>
</compile_context>

<pallas_src>
import functools

import jax
import jax.numpy as jnp
from jax import lax
from jax.experimental import pallas as pl
from jax.experimental.pallas import tpu as pltpu


def _puremf_kernel(users_idx_ref, items_idx_ref,   # scalar prefetch (SMEM)
                   u_tbl_ref, i_tbl_ref,           # embedding tables (HBM, pl.ANY)
                   o_ref,                          # (1, TB) lane-dense output block
                   u_buf, i_buf, sem,              # VMEM scratch + DMA semaphores
                   *, tb):
    b = pl.program_id(0)
    base = b * tb

    # --- Gather TB user rows and TB item rows for this block (row DMAs). ---
    @pl.loop(0, tb)
    def _(r):
        u = users_idx_ref[base + r]
        i = items_idx_ref[base + r]
        pltpu.make_async_copy(u_tbl_ref.at[u], u_buf.at[r], sem.at[0]).start()
        pltpu.make_async_copy(i_tbl_ref.at[i], i_buf.at[r], sem.at[1]).start()

    # --- Wait for all 2*TB row copies (one row-sized wait per started copy). ---
    @pl.loop(0, tb)
    def _(r):
        pltpu.make_async_copy(u_tbl_ref.at[0], u_buf.at[r], sem.at[0]).wait()
        pltpu.make_async_copy(i_tbl_ref.at[0], i_buf.at[r], sem.at[1]).wait()

    # --- Batched dot products + sigmoid for the whole block in one shot. ---
    u = u_buf[...].astype(jnp.float32)                # (TB, D)
    v = i_buf[...].astype(jnp.float32)                # (TB, D)
    scores = jnp.sum(u * v, axis=-1)                  # (TB,) per-pair dot product
    o_ref[...] = jax.nn.sigmoid(scores).reshape(1, tb).astype(o_ref.dtype)


def puremf_forward(users, items, user_emb, item_emb, *, tb=256):
    """Pallas implementation of PureMF.forward.

    users, items : int vectors of shape (B,)
    user_emb     : (num_users, D) float32 (or bfloat16) embedding table
    item_emb     : (num_items, D) float32 (or bfloat16) embedding table
    returns      : (B,) float32 sigmoid scores
    """
    B = users.shape[0]
    D = user_emb.shape[1]
    users = users.astype(jnp.int32)   # .long() in PyTorch; int32 indices on TPU
    items = items.astype(jnp.int32)

    nb = pl.cdiv(B, tb)
    b_pad = nb * tb
    if b_pad != B:
        # Pad with index 0 (always a valid row); padded scores are sliced off.
        users = jnp.pad(users, (0, b_pad - B))
        items = jnp.pad(items, (0, b_pad - B))

    out = pl.pallas_call(
        functools.partial(_puremf_kernel, tb=tb),
        out_shape=jax.ShapeDtypeStruct((nb, tb), jnp.float32),
        grid_spec=pltpu.PrefetchScalarGridSpec(
            num_scalar_prefetch=2,                  # users idx, items idx -> SMEM
            grid=(nb,),                             # TB pairs per grid step
            in_specs=[
                pl.BlockSpec(memory_space=pl.ANY),  # user table stays in HBM
                pl.BlockSpec(memory_space=pl.ANY),  # item table stays in HBM
            ],
            out_specs=pl.BlockSpec((1, tb), lambda b, u_idx, i_idx: (b, 0)),
            scratch_shapes=[
                pltpu.VMEM((tb, D), user_emb.dtype),   # gathered user rows
                pltpu.VMEM((tb, D), item_emb.dtype),   # gathered item rows
                pltpu.SemaphoreType.DMA((2,)),         # one sem per table
            ],
        ),
        compiler_params=pltpu.CompilerParams(
            dimension_semantics=("parallel",)),     # megacore-shardable on v7x
    )(users, items, user_emb, item_emb)

    return out.reshape(b_pad)[:B]


if __name__ == "__main__":
    # Deterministic N(0, 1) embedding init (PureMF.__init_weight) — synthetic,
    # no checkpoint loading. Small shapes; latent_dim=64 is the LightGCN default.
    key = jax.random.PRNGKey(0)
    k_user, k_item, k_u_idx, k_i_idx = jax.random.split(key, 4)

    num_users, num_items, latent_dim = 64, 96, 64
    batch = 40   # deliberately not a multiple of TB to exercise padding

    embedding_user = jax.random.normal(
        k_user, (num_users, latent_dim), dtype=jnp.float32)
    embedding_item = jax.random.normal(
        k_item, (num_items, latent_dim), dtype=jnp.float32)

    users = jax.random.randint(k_u_idx, (batch,), 0, num_users, dtype=jnp.int32)
    items = jax.random.randint(k_i_idx, (batch,), 0, num_items, dtype=jnp.int32)

    scores = puremf_forward(users, items, embedding_user, embedding_item)
    scores = jax.block_until_ready(scores)

    # Pure-JAX reference for correctness.
    ref = jax.nn.sigmoid(
        jnp.sum(embedding_user[users] * embedding_item[items], axis=1))

    assert scores.shape == (batch,)
    assert scores.dtype == jnp.float32
    assert jnp.allclose(scores, ref, atol=1e-5, rtol=1e-5)

    print("KERNEL_OK")
</pallas_src>

<mosaic_0001>
module attributes {stable_mosaic.version = 11 : i64} {
  func.func @_puremf_kernel(%arg0: i32, %arg1: memref<256xi32, #tpu.memory_space<smem>>, %arg2: memref<256xi32, #tpu.memory_space<smem>>, %arg3: memref<64x64xf32, #tpu.memory_space<any>>, %arg4: memref<96x64xf32, #tpu.memory_space<any>>, %arg5: memref<1x256xf32, #tpu.memory_space<vmem>>, %arg6: memref<256x64xf32, #tpu.memory_space<vmem>>, %arg7: memref<256x64xf32, #tpu.memory_space<vmem>>, %arg8: memref<2x!tpu.dma_semaphore, #tpu.memory_space<semaphore_mem>>) attributes {dimension_semantics = [#tpu.dimension_semantics<parallel>], iteration_bounds = array<i64: 1>, scalar_prefetch = 2 : i64, scratch_operands = 3 : i64, tpu.core_type = #tpu.core_type<tc>, window_params = [{}, {}, {transform_indices = @transform_2, window_bounds = array<i64: 1, 256>}]} {
    %c256_i32 = arith.constant 256 : i32
    %0 = arith.muli %arg0, %c256_i32 : i32
    %c0_i32 = arith.constant 0 : i32
    %c256_i32_0 = arith.constant 256 : i32
    %1 = arith.addi %c0_i32, %c256_i32_0 : i32
    %c1_i32 = arith.constant 1 : i32
    scf.for %arg9 = %c0_i32 to %1 step %c1_i32  : i32 {
      %c1_i32_12 = arith.constant 1 : i32
      %14 = arith.muli %arg9, %c1_i32_12 : i32
      %c0_i32_13 = arith.constant 0 : i32
      %15 = arith.addi %c0_i32_13, %14 : i32
      %16 = arith.addi %0, %15 : i32
      %17 = arith.index_cast %16 : i32 to index
      %18 = memref.load %arg1[%17] : memref<256xi32, #tpu.memory_space<smem>>
      %19 = arith.addi %0, %15 : i32
      %20 = arith.index_cast %19 : i32 to index
      %21 = memref.load %arg2[%20] : memref<256xi32, #tpu.memory_space<smem>>
      %c0_i32_14 = arith.constant 0 : i32
      %c0_i32_15 = arith.constant 0 : i32
      %22 = tpu.memref_slice %arg3[%18, %c0_i32_15] : memref<64x64xf32, #tpu.memory_space<any>> -> memref<1x64xf32, #tpu.memory_space<any>>
      %23 = tpu.memref_squeeze %22 : memref<1x64xf32, #tpu.memory_space<any>> -> memref<64xf32, #tpu.memory_space<any>>
      %c0_i32_16 = arith.constant 0 : i32
      %24 = tpu.memref_slice %arg6[%15, %c0_i32_16] : memref<256x64xf32, #tpu.memory_space<vmem>> -> memref<1x64xf32, #tpu.memory_space<vmem>>
      %25 = tpu.memref_squeeze %24 : memref<1x64xf32, #tpu.memory_space<vmem>> -> memref<64xf32, #tpu.memory_space<vmem>>
      %26 = tpu.memref_slice %arg8[%c0_i32_14] : memref<2x!tpu.dma_semaphore, #tpu.memory_space<semaphore_mem>> -> memref<1x!tpu.dma_semaphore, #tpu.memory_space<semaphore_mem>>
      %27 = tpu.memref_squeeze %26 : memref<1x!tpu.dma_semaphore, #tpu.memory_space<semaphore_mem>> -> memref<!tpu.dma_semaphore, #tpu.memory_space<semaphore_mem>>
      tpu.enqueue_dma source(%23 : memref<64xf32, #tpu.memory_space<any>>) target(%25 : memref<64xf32, #tpu.memory_space<vmem>>) target_semaphore(%27 : memref<!tpu.dma_semaphore, #tpu.memory_space<semaphore_mem>>)
      %c1_i32_17 = arith.constant 1 : i32
      %c0_i32_18 = arith.constant 0 : i32
      %28 = tpu.memref_slice %arg4[%21, %c0_i32_18] : memref<96x64xf32, #tpu.memory_space<any>> -> memref<1x64xf32, #tpu.memory_space<any>>
      %29 = tpu.memref_squeeze %28 : memref<1x64xf32, #tpu.memory_space<any>> -> memref<64xf32, #tpu.memory_space<any>>
      %c0_i32_19 = arith.constant 0 : i32
      %30 = tpu.memref_slice %arg7[%15, %c0_i32_19] : memref<256x64xf32, #tpu.memory_space<vmem>> -> memref<1x64xf32, #tpu.memory_space<vmem>>
      %31 = tpu.memref_squeeze %30 : memref<1x64xf32, #tpu.memory_space<vmem>> -> memref<64xf32, #tpu.memory_space<vmem>>
      %32 = tpu.memref_slice %arg8[%c1_i32_17] : memref<2x!tpu.dma_semaphore, #tpu.memory_space<semaphore_mem>> -> memref<1x!tpu.dma_semaphore, #tpu.memory_space<semaphore_mem>>
      %33 = tpu.memref_squeeze %32 : memref<1x!tpu.dma_semaphore, #tpu.memory_space<semaphore_mem>> -> memref<!tpu.dma_semaphore, #tpu.memory_space<semaphore_mem>>
      tpu.enqueue_dma source(%29 : memref<64xf32, #tpu.memory_space<any>>) target(%31 : memref<64xf32, #tpu.memory_space<vmem>>) target_semaphore(%33 : memref<!tpu.dma_semaphore, #tpu.memory_space<semaphore_mem>>)
    }
    %c256_i32_1 = arith.constant 256 : i32
    %c0_i32_2 = arith.constant 0 : i32
    %c256_i32_3 = arith.constant 256 : i32
    %2 = arith.addi %c0_i32_2, %c256_i32_3 : i32
    %c1_i32_4 = arith.constant 1 : i32
    scf.for %arg9 = %c0_i32_2 to %2 step %c1_i32_4  : i32 {
      %c1_i32_12 = arith.constant 1 : i32
      %14 = arith.muli %arg9, %c1_i32_12 : i32
      %c0_i32_13 = arith.constant 0 : i32
      %15 = arith.addi %c0_i32_13, %14 : i32
      %c0_i32_14 = arith.constant 0 : i32
      %c0_i32_15 = arith.constant 0 : i32
      %c0_i32_16 = arith.constant 0 : i32
      %16 = tpu.memref_slice %arg3[%c0_i32_14, %c0_i32_16] : memref<64x64xf32, #tpu.memory_space<any>> -> memref<1x64xf32, #tpu.memory_space<any>>
      %17 = tpu.memref_squeeze %16 : memref<1x64xf32, #tpu.memory_space<any>> -> memref<64xf32, #tpu.memory_space<any>>
      %c0_i32_17 = arith.constant 0 : i32
      %18 = tpu.memref_slice %arg6[%15, %c0_i32_17] : memref<256x64xf32, #tpu.memory_space<vmem>> -> memref<1x64xf32, #tpu.memory_space<vmem>>
      %19 = tpu.memref_squeeze %18 : memref<1x64xf32, #tpu.memory_space<vmem>> -> memref<64xf32, #tpu.memory_space<vmem>>
      %20 = tpu.memref_slice %arg8[%c0_i32_15] : memref<2x!tpu.dma_semaphore, #tpu.memory_space<semaphore_mem>> -> memref<1x!tpu.dma_semaphore, #tpu.memory_space<semaphore_mem>>
      %21 = tpu.memref_squeeze %20 : memref<1x!tpu.dma_semaphore, #tpu.memory_space<semaphore_mem>> -> memref<!tpu.dma_semaphore, #tpu.memory_space<semaphore_mem>>
      tpu.wait_dma2 semaphore(%21 : memref<!tpu.dma_semaphore, #tpu.memory_space<semaphore_mem>>) src(%17 : memref<64xf32, #tpu.memory_space<any>>) dst(%19 : memref<64xf32, #tpu.memory_space<vmem>>)
      %c0_i32_18 = arith.constant 0 : i32
      %c1_i32_19 = arith.constant 1 : i32
      %c0_i32_20 = arith.constant 0 : i32
      %22 = tpu.memref_slice %arg4[%c0_i32_18, %c0_i32_20] : memref<96x64xf32, #tpu.memory_space<any>> -> memref<1x64xf32, #tpu.memory_space<any>>
      %23 = tpu.memref_squeeze %22 : memref<1x64xf32, #tpu.memory_space<any>> -> memref<64xf32, #tpu.memory_space<any>>
      %c0_i32_21 = arith.constant 0 : i32
      %24 = tpu.memref_slice %arg7[%15, %c0_i32_21] : memref<256x64xf32, #tpu.memory_space<vmem>> -> memref<1x64xf32, #tpu.memory_space<vmem>>
      %25 = tpu.memref_squeeze %24 : memref<1x64xf32, #tpu.memory_space<vmem>> -> memref<64xf32, #tpu.memory_space<vmem>>
      %26 = tpu.memref_slice %arg8[%c1_i32_19] : memref<2x!tpu.dma_semaphore, #tpu.memory_space<semaphore_mem>> -> memref<1x!tpu.dma_semaphore, #tpu.memory_space<semaphore_mem>>
      %27 = tpu.memref_squeeze %26 : memref<1x!tpu.dma_semaphore, #tpu.memory_space<semaphore_mem>> -> memref<!tpu.dma_semaphore, #tpu.memory_space<semaphore_mem>>
      tpu.wait_dma2 semaphore(%27 : memref<!tpu.dma_semaphore, #tpu.memory_space<semaphore_mem>>) src(%23 : memref<64xf32, #tpu.memory_space<any>>) dst(%25 : memref<64xf32, #tpu.memory_space<vmem>>)
    }
    %c256_i32_5 = arith.constant 256 : i32
    %c0 = arith.constant 0 : index
    %c0_6 = arith.constant 0 : index
    %3 = vector.load %arg6[%c0, %c0_6] : memref<256x64xf32, #tpu.memory_space<vmem>>, vector<256x64xf32>
    %c0_7 = arith.constant 0 : index
    %c0_8 = arith.constant 0 : index
    %4 = vector.load %arg7[%c0_7, %c0_8] : memref<256x64xf32, #tpu.memory_space<vmem>>, vector<256x64xf32>
    %5 = arith.mulf %3, %4 : vector<256x64xf32>
    %cst = arith.constant dense<0.000000e+00> : vector<256xf32>
    %6 = vector.multi_reduction <add>, %5, %cst [1] : vector<256x64xf32> to vector<256xf32>
    %7 = arith.negf %6 : vector<256xf32>
    %8 = math.exp %7 : vector<256xf32>
    %cst_9 = arith.constant 1.000000e+00 : f32
    %9 = vector.broadcast %cst_9 : f32 to vector<256xf32>
    %10 = arith.addf %9, %8 : vector<256xf32>
    %11 = arith.divf %9, %10 : vector<256xf32>
    %12 = vector.shape_cast %11 : vector<256xf32> to vector<1x256xf32>
    %c0_10 = arith.constant 0 : index
    %c0_11 = arith.constant 0 : index
    %13 = vector.load %arg5[%c0_10, %c0_11] : memref<1x256xf32, #tpu.memory_space<vmem>>, vector<1x256xf32>
    tpu.vector_store %arg5[%c0_10, %c0_11], %12 {strides = array<i32>} : memref<1x256xf32, #tpu.memory_space<vmem>>, vector<1x256xf32>,
    return
  }
  func.func @transform_2(%arg0: i32, %arg1: memref<256xi32, #tpu.memory_space<smem>>, %arg2: memref<256xi32, #tpu.memory_space<smem>>) -> (i32, i32) {
    %c0_i32 = arith.constant 0 : i32
    %c0_i32_0 = arith.constant 0 : i32
    return %arg0, %c0_i32 : i32, i32
  }
}

</mosaic_0001>

<llo_original>
// kernel: tpu_custom_call.1
$region0: #{tpu_custom_call.1}
  #allocation0 [shape = 'u32[]', space=smem, size = 0x4, offset = 0x4, fixed_abs, tag = 'smem constant byte address 0x4 - core index']
  #allocation1 [shape = 'u32[144,128]{1,0:T(1,128)}', space=vmem, size = 0x12000, scoped, tag = 'internal scratch']
  #allocation2 [shape = 'f32[256,64]{1,0:T(8,128)}', space=vmem, size = 0x20000, scoped, tag = 'scratch operand']
  #allocation3 [shape = 'f32[256,64]{1,0:T(8,128)}', space=vmem, size = 0x20000, scoped, tag = 'scratch operand']
  #allocation4 [shape = 's32[2]{0}', space=sflag, size = 0x8, scoped, tag = 'scratch operand']
  #allocation5 [shape = 's32[1]{0}', space=sflag, size = 0x4, scoped, tag = 'scoped memory for tpu_custom_call.1']
  #allocation6 [shape = 'u8[1024]{0}', space=smem, size = 0x400, scoped, tag = 'prefetched SMEM operand 0']
  #allocation7 [shape = 'u8[1024]{0}', space=smem, size = 0x400, scoped, tag = 'prefetched SMEM operand 1']
  #allocation10 [shape = 's32[]', space=sflag, size = 0x4, offset = 0, fixed_abs, tag = 'sflag constant byte address 0x0 - dummy sync flag']
  #allocation11 [shape = 's32[]', space=sflag, size = 0x4, offset = 0, fixed_abs, tag = 'sflag constant byte address 0x0 - dummy sync flag']
  %s0 = inlined_call_operand.vmem [shape: s32[256], index: 0, kind: input, shape index: {}]
  %s1 = inlined_call_operand.vmem [shape: s32[256], index: 1, kind: input, shape index: {}]
  %s2 = inlined_call_operand.vmem [shape: f32[64,64], index: 2, kind: input, shape index: {}]
  %s3 = inlined_call_operand.vmem [shape: f32[96,64], index: 3, kind: input, shape index: {}]
  %s4 = inlined_call_operand.hbm [shape: f32[1,256], index: 4, kind: output, shape index: {}]
  %s5 = sld [smem:[#allocation0]]
  $region84: #{tpu_custom_call.1} parent=0
    _
  %s7 = ssub.s32 1, %s5
  %s8 = scalar_select 0, %s7, %s5
  %s9 = sshll.u32 %s0, 4
  %s10 = int_to_ptr.vmem [resolvable:$true] %s9
  %12 = dma.vmem_to_smem %s10, 32, [#allocation6], [#allocation5]
  %s13 = sshll.u32 %s1, 4
  %s14 = int_to_ptr.vmem [resolvable:$true] %s13
  %16 = dma.vmem_to_smem %s14, 32, [#allocation7], [#allocation5]
  %17 = dma.done [#allocation5], 64
  %18 = sfence
  $region1: #{tpu_custom_call.1} parent=0
    #allocation8 [shape = 'u8[1024]{0}', space=vmem, size = 0x400, scoped, tag = 'output window, operand 0, single buffered']
    #allocation9 [shape = 's32[1]{0}', space=sflag, size = 0x4, scoped, tag = 'scoped memory for tpu_custom_call.1']
    %19 = vsyncpa [#allocation9], 0
    %s20 = smul.u32 0, 256
    loop: start=0, step=1, limit=256
    $region2: #{tpu_custom_call.1} parent=1 // loop_pre_header
      _
    $region3: #{tpu_custom_call.1} parent=1 // loop_header
      %s22 = sphi 0, %s26
      %p23 = scmp.ge.s32.totalorder %s22, 256
    $region4: #{tpu_custom_call.1} parent=1 // loop_header_branch
      %25 = sbr.rel (%p23) target = $region8
    $region5: #{tpu_custom_call.1} parent=1 // loop_body
      %s27 = sadd.s32 %s20, %s22
      %s28 = sld [smem:[#allocation6 + %s27]]
      %s29 = sld [smem:[#allocation7 + %s27]]
      %s30 = scalar_lea.vmem %s2, %s28
      %s31 = scalar_lea.vmem [#allocation2], %s22
      %p33 = scmp.lt.u32.totalorder 1, 8
      %p34 = pneg %p33
      // Predicated region
      $region9: #{tpu_custom_call.1} parent=5 // pred_check
        _
      $region10: #{tpu_custom_call.1} parent=5 // pred_check_branch
        %36 = sbr.rel (%p33) target = $region12
      $region11: #{tpu_custom_call.1} parent=5 // pred_region
        %s51 = sand.u32 1, 7
        %p52 = scmp.eq.s32.totalorder %s51, 0
        %p53 = pneg %p52
        // Predicated region
        $region24: #{tpu_custom_call.1} parent=11 // pred_check
          _
        $region25: #{tpu_custom_call.1} parent=11 // pred_check_branch
          %55 = sbr.rel (%p52) target = $region27
        $region26: #{tpu_custom_call.1} parent=11 // pred_region
          %s56 = sand.u32 1, 7
          %s57 = ssub.s32 1, %s56
          %s58 = scalar_lea.vmem %s30, %s57
          %s59 = ssub.s32 1, %s56
          %s60 = scalar_lea.vmem %s31, %s59 [#allocation2]
          %s61 = sshllo.u32 0, %s56
          loop: start=0, step=1, limit=1
          $region28: #{tpu_custom_call.1} parent=26 // loop_pre_header
            _
          $region29: #{tpu_custom_call.1} parent=26 // loop_header
            %s63 = sphi 0, %s67
            %p64 = scmp.ge.s32.totalorder %s63, 1
            %s68 = sphi %s58, %s58
            %s69 = sphi %s60, %s60
          $region30: #{tpu_custom_call.1} parent=26 // loop_header_branch
            %66 = sbr.rel (%p64) target = $region34
          $region31: #{tpu_custom_call.1} parent=26 // loop_body
            %v70 = vld [vmem:[%s68] sm:%s61]
            %71 = vst [vmem:[%s69] sm:%s61] %v70
          $region32: #{tpu_custom_call.1} parent=26 // loop_footer
            %s67 = sadd.s32 1, %s63
          $region33: #{tpu_custom_call.1} parent=26 // loop_footer_branch
            %62 = sbr.rel target = $region29
          $region34: #{tpu_custom_call.1} parent=26 // loop_exit
            _
        $region27: #{tpu_custom_call.1} parent=11 // pred_fallthru
          _
      $region12: #{tpu_custom_call.1} parent=5 // pred_fallthru
        _
      // Predicated region
      $region13: #{tpu_custom_call.1} parent=5 // pred_check
        %p37 = pneg %p33
      $region14: #{tpu_custom_call.1} parent=5 // pred_check_branch
        %39 = sbr.rel (%p37) target = $region16
      $region15: #{tpu_custom_call.1} parent=5 // pred_region
        %s40 = sshllo.u32 0, 1
        loop: start=0, step=1, limit=1
        $region17: #{tpu_custom_call.1} parent=15 // loop_pre_header
          _
        $region18: #{tpu_custom_call.1} parent=15 // loop_header
          %s42 = sphi 0, %s46
          %p43 = scmp.ge.s32.totalorder %s42, 1
          %s47 = sphi %s30, %s30
          %s48 = sphi %s31, %s31
        $region19: #{tpu_custom_call.1} parent=15 // loop_header_branch
          %45 = sbr.rel (%p43) target = $region23
        $region20: #{tpu_custom_call.1} parent=15 // loop_body
          %v49 = vld [vmem:[%s47] sm:%s40]
          %50 = vst [vmem:[%s48] sm:%s40] %v49
        $region21: #{tpu_custom_call.1} parent=15 // loop_footer
          %s46 = sadd.s32 1, %s42
        $region22: #{tpu_custom_call.1} parent=15 // loop_footer_branch
          %41 = sbr.rel target = $region18
        $region23: #{tpu_custom_call.1} parent=15 // loop_exit
          _
      $region16: #{tpu_custom_call.1} parent=5 // pred_fallthru
        _
      // Predicated region
      $region35: #{tpu_custom_call.1} parent=5 // pred_check
        _
      $region36: #{tpu_custom_call.1} parent=5 // pred_check_branch
        %74 = sbr.rel (0) target = $region38
      $region37: #{tpu_custom_call.1} parent=5 // pred_region
        %75 = vsyncadd [#allocation4], 16
      $region38: #{tpu_custom_call.1} parent=5 // pred_fallthru
        _
      %s76 = scalar_lea.vmem %s3, %s29
      %s77 = scalar_lea.vmem [#allocation3], %s22
      %s78 = scalar_lea.sflag [#allocation4], 1
      %p80 = scmp.lt.u32.totalorder 1, 8
      %p81 = pneg %p80
      // Predicated region
      $region39: #{tpu_custom_call.1} parent=5 // pred_check
        _
      $region40: #{tpu_custom_call.1} parent=5 // pred_check_branch
        %83 = sbr.rel (%p80) target = $region42
      $region41: #{tpu_custom_call.1} parent=5 // pred_region
        %s98 = sand.u32 1, 7
        %p99 = scmp.eq.s32.totalorder %s98, 0
        %p100 = pneg %p99
        // Predicated region
        $region54: #{tpu_custom_call.1} parent=41 // pred_check
          _
        $region55: #{tpu_custom_call.1} parent=41 // pred_check_branch
          %102 = sbr.rel (%p99) target = $region57
        $region56: #{tpu_custom_call.1} parent=41 // pred_region
          %s103 = sand.u32 1, 7
          %s104 = ssub.s32 1, %s103
          %s105 = scalar_lea.vmem %s76, %s104
          %s106 = ssub.s32 1, %s103
          %s107 = scalar_lea.vmem %s77, %s106 [#allocation3]
          %s108 = sshllo.u32 0, %s103
          loop: start=0, step=1, limit=1
          $region58: #{tpu_custom_call.1} parent=56 // loop_pre_header
            _
          $region59: #{tpu_custom_call.1} parent=56 // loop_header
            %s110 = sphi 0, %s114
            %p111 = scmp.ge.s32.totalorder %s110, 1
            %s115 = sphi %s105, %s105
            %s116 = sphi %s107, %s107
          $region60: #{tpu_custom_call.1} parent=56 // loop_header_branch
            %113 = sbr.rel (%p111) target = $region64
          $region61: #{tpu_custom_call.1} parent=56 // loop_body
            %v117 = vld [vmem:[%s115] sm:%s108]
            %118 = vst [vmem:[%s116] sm:%s108] %v117
          $region62: #{tpu_custom_call.1} parent=56 // loop_footer
            %s114 = sadd.s32 1, %s110
          $region63: #{tpu_custom_call.1} parent=56 // loop_footer_branch
            %109 = sbr.rel target = $region59
          $region64: #{tpu_custom_call.1} parent=56 // loop_exit
            _
        $region57: #{tpu_custom_call.1} parent=41 // pred_fallthru
          _
      $region42: #{tpu_custom_call.1} parent=5 // pred_fallthru
        _
      // Predicated region
      $region43: #{tpu_custom_call.1} parent=5 // pred_check
        %p84 = pneg %p80
      $region44: #{tpu_custom_call.1} parent=5 // pred_check_branch
        %86 = sbr.rel (%p84) target = $region46
      $region45: #{tpu_custom_call.1} parent=5 // pred_region
        %s87 = sshllo.u32 0, 1
        loop: start=0, step=1, limit=1
        $region47: #{tpu_custom_call.1} parent=45 // loop_pre_header
          _
        $region48: #{tpu_custom_call.1} parent=45 // loop_header
          %s89 = sphi 0, %s93
          %p90 = scmp.ge.s32.totalorder %s89, 1
          %s94 = sphi %s76, %s76
          %s95 = sphi %s77, %s77
        $region49: #{tpu_custom_call.1} parent=45 // loop_header_branch
          %92 = sbr.rel (%p90) target = $region53
        $region50: #{tpu_custom_call.1} parent=45 // loop_body
          %v96 = vld [vmem:[%s94] sm:%s87]
          %97 = vst [vmem:[%s95] sm:%s87] %v96
        $region51: #{tpu_custom_call.1} parent=45 // loop_footer
          %s93 = sadd.s32 1, %s89
        $region52: #{tpu_custom_call.1} parent=45 // loop_footer_branch
          %88 = sbr.rel target = $region48
        $region53: #{tpu_custom_call.1} parent=45 // loop_exit
          _
      $region46: #{tpu_custom_call.1} parent=5 // pred_fallthru
        _
      // Predicated region
      $region65: #{tpu_custom_call.1} parent=5 // pred_check
        _
      $region66: #{tpu_custom_call.1} parent=5 // pred_check_branch
        %121 = sbr.rel (0) target = $region68
      $region67: #{tpu_custom_call.1} parent=5 // pred_region
        %122 = vsyncadd %s78, 16
      $region68: #{tpu_custom_call.1} parent=5 // pred_fallthru
        _
    $region6: #{tpu_custom_call.1} parent=1 // loop_footer
      %s26 = sadd.s32 1, %s22
    $region7: #{tpu_custom_call.1} parent=1 // loop_footer_branch
      %21 = sbr.rel target = $region3
    $region8: #{tpu_custom_call.1} parent=1 // loop_exit
      _
    loop: start=0, step=1, limit=256
    $region69: #{tpu_custom_call.1} parent=1 // loop_pre_header
      _
    $region70: #{tpu_custom_call.1} parent=1 // loop_header
      %s124 = sphi 0, %s128
      %p125 = scmp.ge.s32.totalorder %s124, 256
    $region71: #{tpu_custom_call.1} parent=1 // loop_header_branch
      %127 = sbr.rel (%p125) target = $region75
    $region72: #{tpu_custom_call.1} parent=1 // loop_body
      %130 = dma.done [#allocation4], 16
      %s131 = scalar_lea.sflag [#allocation4], 1
      %133 = dma.done %s131, 16
    $region73: #{tpu_custom_call.1} parent=1 // loop_footer
      %s128 = sadd.s32 1, %s124
    $region74: #{tpu_custom_call.1} parent=1 // loop_footer_branch
      %123 = sbr.rel target = $region70
    $region75: #{tpu_custom_call.1} parent=1 // loop_exit
      _
    %v134 = vld [vmem:[#allocation2] sm:$0xff]
    %v135 = vld [vmem:[#allocation2 + $0x8] sm:$0xff]
    %v136 = vld [vmem:[#allocation2 + $0x10] sm:$0xff]
    %v137 = vld [vmem:[#allocation2 + $0x18] sm:$0xff]
    %v138 = vld [vmem:[#allocation2 + $0x20] sm:$0xff]
    %v139 = vld [vmem:[#allocation2 + $0x28] sm:$0xff]
    %v140 = vld [vmem:[#allocation2 + $0x30] sm:$0xff]
    %v141 = vld [vmem:[#allocation2 + $0x38] sm:$0xff]
    %v142 = vld [vmem:[#allocation2 + $0x40] sm:$0xff]
    %v143 = vld [vmem:[#allocation2 + $0x48] sm:$0xff]
    %v144 = vld [vmem:[#allocation2 + $0x50] sm:$0xff]
    %v145 = vld [vmem:[#allocation2 + $0x58] sm:$0xff]
    %v146 = vld [vmem:[#allocation2 + $0x60] sm:$0xff]
    %v147 = vld [vmem:[#allocation2 + $0x68] sm:$0xff]
    %v148 = vld [vmem:[#allocation2 + $0x70] sm:$0xff]
    %v149 = vld [vmem:[#allocation2 + $0x78] sm:$0xff]
    %v150 = vld [vmem:[#allocation2 + $0x80] sm:$0xff]
    %v151 = vld [vmem:[#allocation2 + $0x88] sm:$0xff]
    %v152 = vld [vmem:[#allocation2 + $0x90] sm:$0xff]
    %v153 = vld [vmem:[#allocation2 + $0x98] sm:$0xff]
    %v154 = vld [vmem:[#allocation2 + $0xa0] sm:$0xff]
    %v155 = vld [vmem:[#allocation2 + $0xa8] sm:$0xff]
    %v156 = vld [vmem:[#allocation2 + $0xb0] sm:$0xff]
    %v157 = vld [vmem:[#allocation2 + $0xb8] sm:$0xff]
    %v158 = vld [vmem:[#allocation2 + $0xc0] sm:$0xff]
    %v159 = vld [vmem:[#allocation2 + $0xc8] sm:$0xff]
    %v160 = vld [vmem:[#allocation2 + $0xd0] sm:$0xff]
    %v161 = vld [vmem:[#allocation2 + $0xd8] sm:$0xff]
    %v162 = vld [vmem:[#allocation2 + $0xe0] sm:$0xff]
    %v163 = vld [vmem:[#allocation2 + $0xe8] sm:$0xff]
    %v164 = vld [vmem:[#allocation2 + $0xf0] sm:$0xff]
    %v165 = vld [vmem:[#allocation2 + $0xf8] sm:$0xff]
    %v166 = vld [vmem:[#allocation3] sm:$0xff]
    %v167 = vld [vmem:[#allocation3 + $0x8] sm:$0xff]
    %v168 = vld [vmem:[#allocation3 + $0x10] sm:$0xff]
    %v169 = vld [vmem:[#allocation3 + $0x18] sm:$0xff]
    %v170 = vld [vmem:[#allocation3 + $0x20] sm:$0xff]
    %v171 = vld [vmem:[#allocation3 + $0x28] sm:$0xff]
    %v172 = vld [vmem:[#allocation3 + $0x30] sm:$0xff]
    %v173 = vld [vmem:[#allocation3 + $0x38] sm:$0xff]
    %v174 = vld [vmem:[#allocation3 + $0x40] sm:$0xff]
    %v175 = vld [vmem:[#allocation3 + $0x48] sm:$0xff]
    %v176 = vld [vmem:[#allocation3 + $0x50] sm:$0xff]
    %v177 = vld [vmem:[#allocation3 + $0x58] sm:$0xff]
    %v178 = vld [vmem:[#allocation3 + $0x60] sm:$0xff]
    %v179 = vld [vmem:[#allocation3 + $0x68] sm:$0xff]
    %v180 = vld [vmem:[#allocation3 + $0x70] sm:$0xff]
    %v181 = vld [vmem:[#allocation3 + $0x78] sm:$0xff]
    %v182 = vld [vmem:[#allocation3 + $0x80] sm:$0xff]
    %v183 = vld [vmem:[#allocation3 + $0x88] sm:$0xff]
    %v184 = vld [vmem:[#allocation3 + $0x90] sm:$0xff]
    %v185 = vld [vmem:[#allocation3 + $0x98] sm:$0xff]
    %v186 = vld [vmem:[#allocation3 + $0xa0] sm:$0xff]
    %v187 = vld [vmem:[#allocation3 + $0xa8] sm:$0xff]
    %v188 = vld [vmem:[#allocation3 + $0xb0] sm:$0xff]
    %v189 = vld [vmem:[#allocation3 + $0xb8] sm:$0xff]
    %v190 = vld [vmem:[#allocation3 + $0xc0] sm:$0xff]
    %v191 = vld [vmem:[#allocation3 + $0xc8] sm:$0xff]
    %v192 = vld [vmem:[#allocation3 + $0xd0] sm:$0xff]
    %v193 = vld [vmem:[#allocation3 + $0xd8] sm:$0xff]
    %v194 = vld [vmem:[#allocation3 + $0xe0] sm:$0xff]
    %v195 = vld [vmem:[#allocation3 + $0xe8] sm:$0xff]
    %v196 = vld [vmem:[#allocation3 + $0xf0] sm:$0xff]
    %v197 = vld [vmem:[#allocation3 + $0xf8] sm:$0xff]
    %v198 = vmul.f32 %v134, %v166
    %v199 = vmul.f32 %v135, %v167
    %v200 = vmul.f32 %v136, %v168
    %v201 = vmul.f32 %v137, %v169
    %v202 = vmul.f32 %v138, %v170
    %v203 = vmul.f32 %v139, %v171
    %v204 = vmul.f32 %v140, %v172
    %v205 = vmul.f32 %v141, %v173
    %v206 = vmul.f32 %v142, %v174
    %v207 = vmul.f32 %v143, %v175
    %v208 = vmul.f32 %v144, %v176
    %v209 = vmul.f32 %v145, %v177
    %v210 = vmul.f32 %v146, %v178
    %v211 = vmul.f32 %v147, %v179
    %v212 = vmul.f32 %v148, %v180
    %v213 = vmul.f32 %v149, %v181
    %v214 = vmul.f32 %v150, %v182
    %v215 = vmul.f32 %v151, %v183
    %v216 = vmul.f32 %v152, %v184
    %v217 = vmul.f32 %v153, %v185
    %v218 = vmul.f32 %v154, %v186
    %v219 = vmul.f32 %v155, %v187
    %v220 = vmul.f32 %v156, %v188
    %v221 = vmul.f32 %v157, %v189
    %v222 = vmul.f32 %v158, %v190
    %v223 = vmul.f32 %v159, %v191
    %v224 = vmul.f32 %v160, %v192
    %v225 = vmul.f32 %v161, %v193
    %v226 = vmul.f32 %v162, %v194
    %v227 = vmul.f32 %v163, %v195
    %v228 = vmul.f32 %v164, %v196
    %v229 = vmul.f32 %v165, %v197
    %vm230 = vcmask 523264
    %v231 = vsel %vm230, %v198, 0.0
    %232 = vadd.xlane.f32.xlu0 %v231
    %v233 = vpop.xlane.xlu0 %232
    %v234 = vsel %vm230, %v199, 0.0
    %235 = vadd.xlane.f32.xlu0 %v234
    %v236 = vpop.xlane.xlu0 %235
    %v237 = vsel %vm230, %v200, 0.0
    %238 = vadd.xlane.f32.xlu0 %v237
    %v239 = vpop.xlane.xlu0 %238
    %v240 = vsel %vm230, %v201, 0.0
    %241 = vadd.xlane.f32.xlu0 %v240
    %v242 = vpop.xlane.xlu0 %241
    %v243 = vsel %vm230, %v202, 0.0
    %244 = vadd.xlane.f32.xlu0 %v243
    %v245 = vpop.xlane.xlu0 %244
    %v246 = vsel %vm230, %v203, 0.0
    %247 = vadd.xlane.f32.xlu0 %v246
    %v248 = vpop.xlane.xlu0 %247
    %v249 = vsel %vm230, %v204, 0.0
    %250 = vadd.xlane.f32.xlu0 %v249
    %v251 = vpop.xlane.xlu0 %250
    %v252 = vsel %vm230, %v205, 0.0
    %253 = vadd.xlane.f32.xlu0 %v252
    %v254 = vpop.xlane.xlu0 %253
    %v255 = vsel %vm230, %v206, 0.0
    %256 = vadd.xlane.f32.xlu0 %v255
    %v257 = vpop.xlane.xlu0 %256
    %v258 = vsel %vm230, %v207, 0.0
    %259 = vadd.xlane.f32.xlu0 %v258
    %v260 = vpop.xlane.xlu0 %259
    %v261 = vsel %vm230, %v208, 0.0
    %262 = vadd.xlane.f32.xlu0 %v261
    %v263 = vpop.xlane.xlu0 %262
    %v264 = vsel %vm230, %v209, 0.0
    %265 = vadd.xlane.f32.xlu0 %v264
    %v266 = vpop.xlane.xlu0 %265
    %v267 = vsel %vm230, %v210, 0.0
    %268 = vadd.xlane.f32.xlu0 %v267
    %v269 = vpop.xlane.xlu0 %268
    %v270 = vsel %vm230, %v211, 0.0
    %271 = vadd.xlane.f32.xlu0 %v270
    %v272 = vpop.xlane.xlu0 %271
    %v273 = vsel %vm230, %v212, 0.0
    %274 = vadd.xlane.f32.xlu0 %v273
    %v275 = vpop.xlane.xlu0 %274
    %v276 = vsel %vm230, %v213, 0.0
    %277 = vadd.xlane.f32.xlu0 %v276
    %v278 = vpop.xlane.xlu0 %277
    %v279 = vsel %vm230, %v214, 0.0
    %280 = vadd.xlane.f32.xlu0 %v279
    %v281 = vpop.xlane.xlu0 %280
    %v282 = vsel %vm230, %v215, 0.0
    %283 = vadd.xlane.f32.xlu0 %v282
    %v284 = vpop.xlane.xlu0 %283
    %v285 = vsel %vm230, %v216, 0.0
    %286 = vadd.xlane.f32.xlu0 %v285
    %v287 = vpop.xlane.xlu0 %286
    %v288 = vsel %vm230, %v217, 0.0
    %289 = vadd.xlane.f32.xlu0 %v288
    %v290 = vpop.xlane.xlu0 %289
    %v291 = vsel %vm230, %v218, 0.0
    %292 = vadd.xlane.f32.xlu0 %v291
    %v293 = vpop.xlane.xlu0 %292
    %v294 = vsel %vm230, %v219, 0.0
    %295 = vadd.xlane.f32.xlu0 %v294
    %v296 = vpop.xlane.xlu0 %295
    %v297 = vsel %vm230, %v220, 0.0
    %298 = vadd.xlane.f32.xlu0 %v297
    %v299 = vpop.xlane.xlu0 %298
    %v300 = vsel %vm230, %v221, 0.0
    %301 = vadd.xlane.f32.xlu0 %v300
    %v302 = vpop.xlane.xlu0 %301
    %v303 = vsel %vm230, %v222, 0.0
    %304 = vadd.xlane.f32.xlu0 %v303
    %v305 = vpop.xlane.xlu0 %304
    %v306 = vsel %vm230, %v223, 0.0
    %307 = vadd.xlane.f32.xlu0 %v306
    %v308 = vpop.xlane.xlu0 %307
    %v309 = vsel %vm230, %v224, 0.0
    %310 = vadd.xlane.f32.xlu0 %v309
    %v311 = vpop.xlane.xlu0 %310
    %v312 = vsel %vm230, %v225, 0.0
    %313 = vadd.xlane.f32.xlu0 %v312
    %v314 = vpop.xlane.xlu0 %313
    %v315 = vsel %vm230, %v226, 0.0
    %316 = vadd.xlane.f32.xlu0 %v315
    %v317 = vpop.xlane.xlu0 %316
    %v318 = vsel %vm230, %v227, 0.0
    %319 = vadd.xlane.f32.xlu0 %v318
    %v320 = vpop.xlane.xlu0 %319
    %v321 = vsel %vm230, %v228, 0.0
    %322 = vadd.xlane.f32.xlu0 %v321
    %v323 = vpop.xlane.xlu0 %322
    %v324 = vsel %vm230, %v229, 0.0
    %325 = vadd.xlane.f32.xlu0 %v324
    %v326 = vpop.xlane.xlu0 %325
    %v327 = vxor.u32 %v233, 2147483648
    %v328 = vxor.u32 %v236, 2147483648
    %v329 = vxor.u32 %v239, 2147483648
    %v330 = vxor.u32 %v242, 2147483648
    %v331 = vxor.u32 %v245, 2147483648
    %v332 = vxor.u32 %v248, 2147483648
    %v333 = vxor.u32 %v251, 2147483648
    %v334 = vxor.u32 %v254, 2147483648
    %v335 = vxor.u32 %v257, 2147483648
    %v336 = vxor.u32 %v260, 2147483648
    %v337 = vxor.u32 %v263, 2147483648
    %v338 = vxor.u32 %v266, 2147483648
    %v339 = vxor.u32 %v269, 2147483648
    %v340 = vxor.u32 %v272, 2147483648
    %v341 = vxor.u32 %v275, 2147483648
    %v342 = vxor.u32 %v278, 2147483648
    %v343 = vxor.u32 %v281, 2147483648
    %v344 = vxor.u32 %v284, 2147483648
    %v345 = vxor.u32 %v287, 2147483648
    %v346 = vxor.u32 %v290, 2147483648
    %v347 = vxor.u32 %v293, 2147483648
    %v348 = vxor.u32 %v296, 2147483648
    %v349 = vxor.u32 %v299, 2147483648
    %v350 = vxor.u32 %v302, 2147483648
    %v351 = vxor.u32 %v305, 2147483648
    %v352 = vxor.u32 %v308, 2147483648
    %v353 = vxor.u32 %v311, 2147483648
    %v354 = vxor.u32 %v314, 2147483648
    %v355 = vxor.u32 %v317, 2147483648
    %v356 = vxor.u32 %v320, 2147483648
    %v357 = vxor.u32 %v323, 2147483648
    %v358 = vxor.u32 %v326, 2147483648
    %v359 = vmul.f32 %v327, 1.442695
    %v360 = vpow.pop %v359
    %v361 = vmul.f32 %v328, 1.442695
    %v362 = vpow.pop %v361
    %v363 = vmul.f32 %v329, 1.442695
    %v364 = vpow.pop %v363
    %v365 = vmul.f32 %v330, 1.442695
    %v366 = vpow.pop %v365
    %v367 = vmul.f32 %v331, 1.442695
    %v368 = vpow.pop %v367
    %v369 = vmul.f32 %v332, 1.442695
    %v370 = vpow.pop %v369
    %v371 = vmul.f32 %v333, 1.442695
    %v372 = vpow.pop %v371
    %v373 = vmul.f32 %v334, 1.442695
    %v374 = vpow.pop %v373
    %v375 = vmul.f32 %v335, 1.442695
    %v376 = vpow.pop %v375
    %v377 = vmul.f32 %v336, 1.442695
    %v378 = vpow.pop %v377
    %v379 = vmul.f32 %v337, 1.442695
    %v380 = vpow.pop %v379
    %v381 = vmul.f32 %v338, 1.442695
    %v382 = vpow.pop %v381
    %v383 = vmul.f32 %v339, 1.442695
    %v384 = vpow.pop %v383
    %v385 = vmul.f32 %v340, 1.442695
    %v386 = vpow.pop %v385
    %v387 = vmul.f32 %v341, 1.442695
    %v388 = vpow.pop %v387
    %v389 = vmul.f32 %v342, 1.442695
    %v390 = vpow.pop %v389
    %v391 = vmul.f32 %v343, 1.442695
    %v392 = vpow.pop %v391
    %v393 = vmul.f32 %v344, 1.442695
    %v394 = vpow.pop %v393
    %v395 = vmul.f32 %v345, 1.442695
    %v396 = vpow.pop %v395
    %v397 = vmul.f32 %v346, 1.442695
    %v398 = vpow.pop %v397
    %v399 = vmul.f32 %v347, 1.442695
    %v400 = vpow.pop %v399
    %v401 = vmul.f32 %v348, 1.442695
    %v402 = vpow.pop %v401
    %v403 = vmul.f32 %v349, 1.442695
    %v404 = vpow.pop %v403
    %v405 = vmul.f32 %v350, 1.442695
    %v406 = vpow.pop %v405
    %v407 = vmul.f32 %v351, 1.442695
    %v408 = vpow.pop %v407
    %v409 = vmul.f32 %v352, 1.442695
    %v410 = vpow.pop %v409
    %v411 = vmul.f32 %v353, 1.442695
    %v412 = vpow.pop %v411
    %v413 = vmul.f32 %v354, 1.442695
    %v414 = vpow.pop %v413
    %v415 = vmul.f32 %v355, 1.442695
    %v416 = vpow.pop %v415
    %v417 = vmul.f32 %v356, 1.442695
    %v418 = vpow.pop %v417
    %v419 = vmul.f32 %v357, 1.442695
    %v420 = vpow.pop %v419
    %v421 = vmul.f32 %v358, 1.442695
    %v422 = vpow.pop %v421
    %v423 = vadd.f32 %v360, 1.0
    %v424 = vadd.f32 %v362, 1.0
    %v425 = vadd.f32 %v364, 1.0
    %v426 = vadd.f32 %v366, 1.0
    %v427 = vadd.f32 %v368, 1.0
    %v428 = vadd.f32 %v370, 1.0
    %v429 = vadd.f32 %v372, 1.0
    %v430 = vadd.f32 %v374, 1.0
    %v431 = vadd.f32 %v376, 1.0
    %v432 = vadd.f32 %v378, 1.0
    %v433 = vadd.f32 %v380, 1.0
    %v434 = vadd.f32 %v382, 1.0
    %v435 = vadd.f32 %v384, 1.0
    %v436 = vadd.f32 %v386, 1.0
    %v437 = vadd.f32 %v388, 1.0
    %v438 = vadd.f32 %v390, 1.0
    %v439 = vadd.f32 %v392, 1.0
    %v440 = vadd.f32 %v394, 1.0
    %v441 = vadd.f32 %v396, 1.0
    %v442 = vadd.f32 %v398, 1.0
    %v443 = vadd.f32 %v400, 1.0
    %v444 = vadd.f32 %v402, 1.0
    %v445 = vadd.f32 %v404, 1.0
    %v446 = vadd.f32 %v406, 1.0
    %v447 = vadd.f32 %v408, 1.0
    %v448 = vadd.f32 %v410, 1.0
    %v449 = vadd.f32 %v412, 1.0
    %v450 = vadd.f32 %v414, 1.0
    %v451 = vadd.f32 %v416, 1.0
    %v452 = vadd.f32 %v418, 1.0
    %v453 = vadd.f32 %v420, 1.0
    %v454 = vadd.f32 %v422, 1.0
    %v455 = vrcp.pop %v423
    %v456 = vmul.f32 1.0, %v455
    %v457 = vrcp.pop %v424
    %v458 = vmul.f32 1.0, %v457
    %v459 = vrcp.pop %v425
    %v460 = vmul.f32 1.0, %v459
    %v461 = vrcp.pop %v426
    %v462 = vmul.f32 1.0, %v461
    %v463 = vrcp.pop %v427
    %v464 = vmul.f32 1.0, %v463
    %v465 = vrcp.pop %v428
    %v466 = vmul.f32 1.0, %v465
    %v467 = vrcp.pop %v429
    %v468 = vmul.f32 1.0, %v467
    %v469 = vrcp.pop %v430
    %v470 = vmul.f32 1.0, %v469
    %v471 = vrcp.pop %v431
    %v472 = vmul.f32 1.0, %v471
    %v473 = vrcp.pop %v432
    %v474 = vmul.f32 1.0, %v473
    %v475 = vrcp.pop %v433
    %v476 = vmul.f32 1.0, %v475
    %v477 = vrcp.pop %v434
    %v478 = vmul.f32 1.0, %v477
    %v479 = vrcp.pop %v435
    %v480 = vmul.f32 1.0, %v479
    %v481 = vrcp.pop %v436
    %v482 = vmul.f32 1.0, %v481
    %v483 = vrcp.pop %v437
    %v484 = vmul.f32 1.0, %v483
    %v485 = vrcp.pop %v438
    %v486 = vmul.f32 1.0, %v485
    %v487 = vrcp.pop %v439
    %v488 = vmul.f32 1.0, %v487
    %v489 = vrcp.pop %v440
    %v490 = vmul.f32 1.0, %v489
    %v491 = vrcp.pop %v441
    %v492 = vmul.f32 1.0, %v491
    %v493 = vrcp.pop %v442
    %v494 = vmul.f32 1.0, %v493
    %v495 = vrcp.pop %v443
    %v496 = vmul.f32 1.0, %v495
    %v497 = vrcp.pop %v444
    %v498 = vmul.f32 1.0, %v497
    %v499 = vrcp.pop %v445
    %v500 = vmul.f32 1.0, %v499
    %v501 = vrcp.pop %v446
    %v502 = vmul.f32 1.0, %v501
    %v503 = vrcp.pop %v447
    %v504 = vmul.f32 1.0, %v503
    %v505 = vrcp.pop %v448
    %v506 = vmul.f32 1.0, %v505
    %v507 = vrcp.pop %v449
    %v508 = vmul.f32 1.0, %v507
    %v509 = vrcp.pop %v450
    %v510 = vmul.f32 1.0, %v509
    %v511 = vrcp.pop %v451
    %v512 = vmul.f32 1.0, %v511
    %v513 = vrcp.pop %v452
    %v514 = vmul.f32 1.0, %v513
    %v515 = vrcp.pop %v453
    %v516 = vmul.f32 1.0, %v515
    %v517 = vrcp.pop %v454
    %v518 = vmul.f32 1.0, %v517
    %v551 = vlaneseq
    %v552 = vshrl.u32 %v551, 7
    %v553 = vsub.s32 0, %v552
    %v554 = vrot.slane %v456, %v553
    %v555 = vlaneseq
    %v556 = vshrl.u32 %v555, 7
    %v557 = vsub.s32 1, %v556
    %v558 = vrot.slane %v456, %v557
    %v559 = vlaneseq
    %v560 = vshrl.u32 %v559, 7
    %v561 = vsub.s32 2, %v560
    %v562 = vrot.slane %v456, %v561
    %v563 = vlaneseq
    %v564 = vshrl.u32 %v563, 7
    %v565 = vsub.s32 3, %v564
    %v566 = vrot.slane %v456, %v565
    %v567 = vlaneseq
    %v568 = vshrl.u32 %v567, 7
    %v569 = vsub.s32 4, %v568
    %v570 = vrot.slane %v456, %v569
    %v571 = vlaneseq
    %v572 = vshrl.u32 %v571, 7
    %v573 = vsub.s32 5, %v572
    %v574 = vrot.slane %v456, %v573
    %v575 = vlaneseq
    %v576 = vshrl.u32 %v575, 7
    %v577 = vsub.s32 6, %v576
    %v578 = vrot.slane %v456, %v577
    %v579 = vlaneseq
    %v580 = vshrl.u32 %v579, 7
    %v581 = vsub.s32 7, %v580
    %v582 = vrot.slane %v456, %v581
    %v583 = vlaneseq
    %v584 = vshrl.u32 %v583, 7
    %v585 = vsub.s32 0, %v584
    %v586 = vrot.slane %v458, %v585
    %v587 = vlaneseq
    %v588 = vshrl.u32 %v587, 7
    %v589 = vsub.s32 1, %v588
    %v590 = vrot.slane %v458, %v589
    %v591 = vlaneseq
    %v592 = vshrl.u32 %v591, 7
    %v593 = vsub.s32 2, %v592
    %v594 = vrot.slane %v458, %v593
    %v595 = vlaneseq
    %v596 = vshrl.u32 %v595, 7
    %v597 = vsub.s32 3, %v596
    %v598 = vrot.slane %v458, %v597
    %v599 = vlaneseq
    %v600 = vshrl.u32 %v599, 7
    %v601 = vsub.s32 4, %v600
    %v602 = vrot.slane %v458, %v601
    %v603 = vlaneseq
    %v604 = vshrl.u32 %v603, 7
    %v605 = vsub.s32 5, %v604
    %v606 = vrot.slane %v458, %v605
    %v607 = vlaneseq
    %v608 = vshrl.u32 %v607, 7
    %v609 = vsub.s32 6, %v608
    %v610 = vrot.slane %v458, %v609
    %v611 = vlaneseq
    %v612 = vshrl.u32 %v611, 7
    %v613 = vsub.s32 7, %v612
    %v614 = vrot.slane %v458, %v613
    %v615 = vlaneseq
    %v616 = vshrl.u32 %v615, 7
    %v617 = vsub.s32 0, %v616
    %v618 = vrot.slane %v460, %v617
    %v619 = vlaneseq
    %v620 = vshrl.u32 %v619, 7
    %v621 = vsub.s32 1, %v620
    %v622 = vrot.slane %v460, %v621
    %v623 = vlaneseq
    %v624 = vshrl.u32 %v623, 7
    %v625 = vsub.s32 2, %v624
    %v626 = vrot.slane %v460, %v625
    %v627 = vlaneseq
    %v628 = vshrl.u32 %v627, 7
    %v629 = vsub.s32 3, %v628
    %v630 = vrot.slane %v460, %v629
    %v631 = vlaneseq
    %v632 = vshrl.u32 %v631, 7
    %v633 = vsub.s32 4, %v632
    %v634 = vrot.slane %v460, %v633
    %v635 = vlaneseq
    %v636 = vshrl.u32 %v635, 7
    %v637 = vsub.s32 5, %v636
    %v638 = vrot.slane %v460, %v637
    %v639 = vlaneseq
    %v640 = vshrl.u32 %v639, 7
    %v641 = vsub.s32 6, %v640
    %v642 = vrot.slane %v460, %v641
    %v643 = vlaneseq
    %v644 = vshrl.u32 %v643, 7
    %v645 = vsub.s32 7, %v644
    %v646 = vrot.slane %v460, %v645
    %v647 = vlaneseq
    %v648 = vshrl.u32 %v647, 7
    %v649 = vsub.s32 0, %v648
    %v650 = vrot.slane %v462, %v649
    %v651 = vlaneseq
    %v652 = vshrl.u32 %v651, 7
    %v653 = vsub.s32 1, %v652
    %v654 = vrot.slane %v462, %v653
    %v655 = vlaneseq
    %v656 = vshrl.u32 %v655, 7
    %v657 = vsub.s32 2, %v656
    %v658 = vrot.slane %v462, %v657
    %v659 = vlaneseq
    %v660 = vshrl.u32 %v659, 7
    %v661 = vsub.s32 3, %v660
    %v662 = vrot.slane %v462, %v661
    %v663 = vlaneseq
    %v664 = vshrl.u32 %v663, 7
    %v665 = vsub.s32 4, %v664
    %v666 = vrot.slane %v462, %v665
    %v667 = vlaneseq
    %v668 = vshrl.u32 %v667, 7
    %v669 = vsub.s32 5, %v668
    %v670 = vrot.slane %v462, %v669
    %v671 = vlaneseq
    %v672 = vshrl.u32 %v671, 7
    %v673 = vsub.s32 6, %v672
    %v674 = vrot.slane %v462, %v673
    %v675 = vlaneseq
    %v676 = vshrl.u32 %v675, 7
    %v677 = vsub.s32 7, %v676
    %v678 = vrot.slane %v462, %v677
    %v679 = vlaneseq
    %v680 = vshrl.u32 %v679, 7
    %v681 = vsub.s32 0, %v680
    %v682 = vrot.slane %v464, %v681
    %v683 = vlaneseq
    %v684 = vshrl.u32 %v683, 7
    %v685 = vsub.s32 1, %v684
    %v686 = vrot.slane %v464, %v685
    %v687 = vlaneseq
    %v688 = vshrl.u32 %v687, 7
    %v689 = vsub.s32 2, %v688
    %v690 = vrot.slane %v464, %v689
    %v691 = vlaneseq
    %v692 = vshrl.u32 %v691, 7
    %v693 = vsub.s32 3, %v692
    %v694 = vrot.slane %v464, %v693
    %v695 = vlaneseq
    %v696 = vshrl.u32 %v695, 7
    %v697 = vsub.s32 4, %v696
    %v698 = vrot.slane %v464, %v697
    %v699 = vlaneseq
    %v700 = vshrl.u32 %v699, 7
    %v701 = vsub.s32 5, %v700
    %v702 = vrot.slane %v464, %v701
    %v703 = vlaneseq
    %v704 = vshrl.u32 %v703, 7
    %v705 = vsub.s32 6, %v704
    %v706 = vrot.slane %v464, %v705
    %v707 = vlaneseq
    %v708 = vshrl.u32 %v707, 7
    %v709 = vsub.s32 7, %v708
    %v710 = vrot.slane %v464, %v709
    %v711 = vlaneseq
    %v712 = vshrl.u32 %v711, 7
    %v713 = vsub.s32 0, %v712
    %v714 = vrot.slane %v466, %v713
    %v715 = vlaneseq
    %v716 = vshrl.u32 %v715, 7
    %v717 = vsub.s32 1, %v716
    %v718 = vrot.slane %v466, %v717
    %v719 = vlaneseq
    %v720 = vshrl.u32 %v719, 7
    %v721 = vsub.s32 2, %v720
    %v722 = vrot.slane %v466, %v721
    %v723 = vlaneseq
    %v724 = vshrl.u32 %v723, 7
    %v725 = vsub.s32 3, %v724
    %v726 = vrot.slane %v466, %v725
    %v727 = vlaneseq
    %v728 = vshrl.u32 %v727, 7
    %v729 = vsub.s32 4, %v728
    %v730 = vrot.slane %v466, %v729
    %v731 = vlaneseq
    %v732 = vshrl.u32 %v731, 7
    %v733 = vsub.s32 5, %v732
    %v734 = vrot.slane %v466, %v733
    %v735 = vlaneseq
    %v736 = vshrl.u32 %v735, 7
    %v737 = vsub.s32 6, %v736
    %v738 = vrot.slane %v466, %v737
    %v739 = vlaneseq
    %v740 = vshrl.u32 %v739, 7
    %v741 = vsub.s32 7, %v740
    %v742 = vrot.slane %v466, %v741
    %v743 = vlaneseq
    %v744 = vshrl.u32 %v743, 7
    %v745 = vsub.s32 0, %v744
    %v746 = vrot.slane %v468, %v745
    %v747 = vlaneseq
    %v748 = vshrl.u32 %v747, 7
    %v749 = vsub.s32 1, %v748
    %v750 = vrot.slane %v468, %v749
    %v751 = vlaneseq
    %v752 = vshrl.u32 %v751, 7
    %v753 = vsub.s32 2, %v752
    %v754 = vrot.slane %v468, %v753
    %v755 = vlaneseq
    %v756 = vshrl.u32 %v755, 7
    %v757 = vsub.s32 3, %v756
    %v758 = vrot.slane %v468, %v757
    %v759 = vlaneseq
    %v760 = vshrl.u32 %v759, 7
    %v761 = vsub.s32 4, %v760
    %v762 = vrot.slane %v468, %v761
    %v763 = vlaneseq
    %v764 = vshrl.u32 %v763, 7
    %v765 = vsub.s32 5, %v764
    %v766 = vrot.slane %v468, %v765
    %v767 = vlaneseq
    %v768 = vshrl.u32 %v767, 7
    %v769 = vsub.s32 6, %v768
    %v770 = vrot.slane %v468, %v769
    %v771 = vlaneseq
    %v772 = vshrl.u32 %v771, 7
    %v773 = vsub.s32 7, %v772
    %v774 = vrot.slane %v468, %v773
    %v775 = vlaneseq
    %v776 = vshrl.u32 %v775, 7
    %v777 = vsub.s32 0, %v776
    %v778 = vrot.slane %v470, %v777
    %v779 = vlaneseq
    %v780 = vshrl.u32 %v779, 7
    %v781 = vsub.s32 1, %v780
    %v782 = vrot.slane %v470, %v781
    %v783 = vlaneseq
    %v784 = vshrl.u32 %v783, 7
    %v785 = vsub.s32 2, %v784
    %v786 = vrot.slane %v470, %v785
    %v787 = vlaneseq
    %v788 = vshrl.u32 %v787, 7
    %v789 = vsub.s32 3, %v788
    %v790 = vrot.slane %v470, %v789
    %v791 = vlaneseq
    %v792 = vshrl.u32 %v791, 7
    %v793 = vsub.s32 4, %v792
    %v794 = vrot.slane %v470, %v793
    %v795 = vlaneseq
    %v796 = vshrl.u32 %v795, 7
    %v797 = vsub.s32 5, %v796
    %v798 = vrot.slane %v470, %v797
    %v799 = vlaneseq
    %v800 = vshrl.u32 %v799, 7
    %v801 = vsub.s32 6, %v800
    %v802 = vrot.slane %v470, %v801
    %v803 = vlaneseq
    %v804 = vshrl.u32 %v803, 7
    %v805 = vsub.s32 7, %v804
    %v806 = vrot.slane %v470, %v805
    %v807 = vlaneseq
    %v808 = vshrl.u32 %v807, 7
    %v809 = vsub.s32 0, %v808
    %v810 = vrot.slane %v472, %v809
    %v811 = vlaneseq
    %v812 = vshrl.u32 %v811, 7
    %v813 = vsub.s32 1, %v812
    %v814 = vrot.slane %v472, %v813
    %v815 = vlaneseq
    %v816 = vshrl.u32 %v815, 7
    %v817 = vsub.s32 2, %v816
    %v818 = vrot.slane %v472, %v817
    %v819 = vlaneseq
    %v820 = vshrl.u32 %v819, 7
    %v821 = vsub.s32 3, %v820
    %v822 = vrot.slane %v472, %v821
    %v823 = vlaneseq
    %v824 = vshrl.u32 %v823, 7
    %v825 = vsub.s32 4, %v824
    %v826 = vrot.slane %v472, %v825
    %v827 = vlaneseq
    %v828 = vshrl.u32 %v827, 7
    %v829 = vsub.s32 5, %v828
    %v830 = vrot.slane %v472, %v829
    %v831 = vlaneseq
    %v832 = vshrl.u32 %v831, 7
    %v833 = vsub.s32 6, %v832
    %v834 = vrot.slane %v472, %v833
    %v835 = vlaneseq
    %v836 = vshrl.u32 %v835, 7
    %v837 = vsub.s32 7, %v836
    %v838 = vrot.slane %v472, %v837
    %v839 = vlaneseq
    %v840 = vshrl.u32 %v839, 7
    %v841 = vsub.s32 0, %v840
    %v842 = vrot.slane %v474, %v841
    %v843 = vlaneseq
    %v844 = vshrl.u32 %v843, 7
    %v845 = vsub.s32 1, %v844
    %v846 = vrot.slane %v474, %v845
    %v847 = vlaneseq
    %v848 = vshrl.u32 %v847, 7
    %v849 = vsub.s32 2, %v848
    %v850 = vrot.slane %v474, %v849
    %v851 = vlaneseq
    %v852 = vshrl.u32 %v851, 7
    %v853 = vsub.s32 3, %v852
    %v854 = vrot.slane %v474, %v853
    %v855 = vlaneseq
    %v856 = vshrl.u32 %v855, 7
    %v857 = vsub.s32 4, %v856
    %v858 = vrot.slane %v474, %v857
    %v859 = vlaneseq
    %v860 = vshrl.u32 %v859, 7
    %v861 = vsub.s32 5, %v860
    %v862 = vrot.slane %v474, %v861
    %v863 = vlaneseq
    %v864 = vshrl.u32 %v863, 7
    %v865 = vsub.s32 6, %v864
    %v866 = vrot.slane %v474, %v865
    %v867 = vlaneseq
    %v868 = vshrl.u32 %v867, 7
    %v869 = vsub.s32 7, %v868
    %v870 = vrot.slane %v474, %v869
    %v871 = vlaneseq
    %v872 = vshrl.u32 %v871, 7
    %v873 = vsub.s32 0, %v872
    %v874 = vrot.slane %v476, %v873
    %v875 = vlaneseq
    %v876 = vshrl.u32 %v875, 7
    %v877 = vsub.s32 1, %v876
    %v878 = vrot.slane %v476, %v877
    %v879 = vlaneseq
    %v880 = vshrl.u32 %v879, 7
    %v881 = vsub.s32 2, %v880
    %v882 = vrot.slane %v476, %v881
    %v883 = vlaneseq
    %v884 = vshrl.u32 %v883, 7
    %v885 = vsub.s32 3, %v884
    %v886 = vrot.slane %v476, %v885
    %v887 = vlaneseq
    %v888 = vshrl.u32 %v887, 7
    %v889 = vsub.s32 4, %v888
    %v890 = vrot.slane %v476, %v889
    %v891 = vlaneseq
    %v892 = vshrl.u32 %v891, 7
    %v893 = vsub.s32 5, %v892
    %v894 = vrot.slane %v476, %v893
    %v895 = vlaneseq
    %v896 = vshrl.u32 %v895, 7
    %v897 = vsub.s32 6, %v896
    %v898 = vrot.slane %v476, %v897
    %v899 = vlaneseq
    %v900 = vshrl.u32 %v899, 7
    %v901 = vsub.s32 7, %v900
    %v902 = vrot.slane %v476, %v901
    %v903 = vlaneseq
    %v904 = vshrl.u32 %v903, 7
    %v905 = vsub.s32 0, %v904
    %v906 = vrot.slane %v478, %v905
    %v907 = vlaneseq
    %v908 = vshrl.u32 %v907, 7
    %v909 = vsub.s32 1, %v908
    %v910 = vrot.slane %v478, %v909
    %v911 = vlaneseq
    %v912 = vshrl.u32 %v911, 7
    %v913 = vsub.s32 2, %v912
    %v914 = vrot.slane %v478, %v913
    %v915 = vlaneseq
    %v916 = vshrl.u32 %v915, 7
    %v917 = vsub.s32 3, %v916
    %v918 = vrot.slane %v478, %v917
    %v919 = vlaneseq
    %v920 = vshrl.u32 %v919, 7
    %v921 = vsub.s32 4, %v920
    %v922 = vrot.slane %v478, %v921
    %v923 = vlaneseq
    %v924 = vshrl.u32 %v923, 7
    %v925 = vsub.s32 5, %v924
    %v926 = vrot.slane %v478, %v925
    %v927 = vlaneseq
    %v928 = vshrl.u32 %v927, 7
    %v929 = vsub.s32 6, %v928
    %v930 = vrot.slane %v478, %v929
    %v931 = vlaneseq
    %v932 = vshrl.u32 %v931, 7
    %v933 = vsub.s32 7, %v932
    %v934 = vrot.slane %v478, %v933
    %v935 = vlaneseq
    %v936 = vshrl.u32 %v935, 7
    %v937 = vsub.s32 0, %v936
    %v938 = vrot.slane %v480, %v937
    %v939 = vlaneseq
    %v940 = vshrl.u32 %v939, 7
    %v941 = vsub.s32 1, %v940
    %v942 = vrot.slane %v480, %v941
    %v943 = vlaneseq
    %v944 = vshrl.u32 %v943, 7
    %v945 = vsub.s32 2, %v944
    %v946 = vrot.slane %v480, %v945
    %v947 = vlaneseq
    %v948 = vshrl.u32 %v947, 7
    %v949 = vsub.s32 3, %v948
    %v950 = vrot.slane %v480, %v949
    %v951 = vlaneseq
    %v952 = vshrl.u32 %v951, 7
    %v953 = vsub.s32 4, %v952
    %v954 = vrot.slane %v480, %v953
    %v955 = vlaneseq
    %v956 = vshrl.u32 %v955, 7
    %v957 = vsub.s32 5, %v956
    %v958 = vrot.slane %v480, %v957
    %v959 = vlaneseq
    %v960 = vshrl.u32 %v959, 7
    %v961 = vsub.s32 6, %v960
    %v962 = vrot.slane %v480, %v961
    %v963 = vlaneseq
    %v964 = vshrl.u32 %v963, 7
    %v965 = vsub.s32 7, %v964
    %v966 = vrot.slane %v480, %v965
    %v967 = vlaneseq
    %v968 = vshrl.u32 %v967, 7
    %v969 = vsub.s32 0, %v968
    %v970 = vrot.slane %v482, %v969
    %v971 = vlaneseq
    %v972 = vshrl.u32 %v971, 7
    %v973 = vsub.s32 1, %v972
    %v974 = vrot.slane %v482, %v973
    %v975 = vlaneseq
    %v976 = vshrl.u32 %v975, 7
    %v977 = vsub.s32 2, %v976
    %v978 = vrot.slane %v482, %v977
    %v979 = vlaneseq
    %v980 = vshrl.u32 %v979, 7
    %v981 = vsub.s32 3, %v980
    %v982 = vrot.slane %v482, %v981
    %v983 = vlaneseq
    %v984 = vshrl.u32 %v983, 7
    %v985 = vsub.s32 4, %v984
    %v986 = vrot.slane %v482, %v985
    %v987 = vlaneseq
    %v988 = vshrl.u32 %v987, 7
    %v989 = vsub.s32 5, %v988
    %v990 = vrot.slane %v482, %v989
    %v991 = vlaneseq
    %v992 = vshrl.u32 %v991, 7
    %v993 = vsub.s32 6, %v992
    %v994 = vrot.slane %v482, %v993
    %v995 = vlaneseq
    %v996 = vshrl.u32 %v995, 7
    %v997 = vsub.s32 7, %v996
    %v998 = vrot.slane %v482, %v997
    %v999 = vlaneseq
    %v1000 = vshrl.u32 %v999, 7
    %v1001 = vsub.s32 0, %v1000
    %v1002 = vrot.slane %v484, %v1001
    %v1003 = vlaneseq
    %v1004 = vshrl.u32 %v1003, 7
    %v1005 = vsub.s32 1, %v1004
    %v1006 = vrot.slane %v484, %v1005
    %v1007 = vlaneseq
    %v1008 = vshrl.u32 %v1007, 7
    %v1009 = vsub.s32 2, %v1008
    %v1010 = vrot.slane %v484, %v1009
    %v1011 = vlaneseq
    %v1012 = vshrl.u32 %v1011, 7
    %v1013 = vsub.s32 3, %v1012
    %v1014 = vrot.slane %v484, %v1013
    %v1015 = vlaneseq
    %v1016 = vshrl.u32 %v1015, 7
    %v1017 = vsub.s32 4, %v1016
    %v1018 = vrot.slane %v484, %v1017
    %v1019 = vlaneseq
    %v1020 = vshrl.u32 %v1019, 7
    %v1021 = vsub.s32 5, %v1020
    %v1022 = vrot.slane %v484, %v1021
    %v1023 = vlaneseq
    %v1024 = vshrl.u32 %v1023, 7
    %v1025 = vsub.s32 6, %v1024
    %v1026 = vrot.slane %v484, %v1025
    %v1027 = vlaneseq
    %v1028 = vshrl.u32 %v1027, 7
    %v1029 = vsub.s32 7, %v1028
    %v1030 = vrot.slane %v484, %v1029
    %v1031 = vlaneseq
    %v1032 = vshrl.u32 %v1031, 7
    %v1033 = vsub.s32 0, %v1032
    %v1034 = vrot.slane %v486, %v1033
    %v1035 = vlaneseq
    %v1036 = vshrl.u32 %v1035, 7
    %v1037 = vsub.s32 1, %v1036
    %v1038 = vrot.slane %v486, %v1037
    %v1039 = vlaneseq
    %v1040 = vshrl.u32 %v1039, 7
    %v1041 = vsub.s32 2, %v1040
    %v1042 = vrot.slane %v486, %v1041
    %v1043 = vlaneseq
    %v1044 = vshrl.u32 %v1043, 7
    %v1045 = vsub.s32 3, %v1044
    %v1046 = vrot.slane %v486, %v1045
    %v1047 = vlaneseq
    %v1048 = vshrl.u32 %v1047, 7
    %v1049 = vsub.s32 4, %v1048
    %v1050 = vrot.slane %v486, %v1049
    %v1051 = vlaneseq
    %v1052 = vshrl.u32 %v1051, 7
    %v1053 = vsub.s32 5, %v1052
    %v1054 = vrot.slane %v486, %v1053
    %v1055 = vlaneseq
    %v1056 = vshrl.u32 %v1055, 7
    %v1057 = vsub.s32 6, %v1056
    %v1058 = vrot.slane %v486, %v1057
    %v1059 = vlaneseq
    %v1060 = vshrl.u32 %v1059, 7
    %v1061 = vsub.s32 7, %v1060
    %v1062 = vrot.slane %v486, %v1061
    %v1063 = vlaneseq
    %v1064 = vshrl.u32 %v1063, 7
    %v1065 = vsub.s32 0, %v1064
    %v1066 = vrot.slane %v488, %v1065
    %v1067 = vlaneseq
    %v1068 = vshrl.u32 %v1067, 7
    %v1069 = vsub.s32 1, %v1068
    %v1070 = vrot.slane %v488, %v1069
    %v1071 = vlaneseq
    %v1072 = vshrl.u32 %v1071, 7
    %v1073 = vsub.s32 2, %v1072
    %v1074 = vrot.slane %v488, %v1073
    %v1075 = vlaneseq
    %v1076 = vshrl.u32 %v1075, 7
    %v1077 = vsub.s32 3, %v1076
    %v1078 = vrot.slane %v488, %v1077
    %v1079 = vlaneseq
    %v1080 = vshrl.u32 %v1079, 7
    %v1081 = vsub.s32 4, %v1080
    %v1082 = vrot.slane %v488, %v1081
    %v1083 = vlaneseq
    %v1084 = vshrl.u32 %v1083, 7
    %v1085 = vsub.s32 5, %v1084
    %v1086 = vrot.slane %v488, %v1085
    %v1087 = vlaneseq
    %v1088 = vshrl.u32 %v1087, 7
    %v1089 = vsub.s32 6, %v1088
    %v1090 = vrot.slane %v488, %v1089
    %v1091 = vlaneseq
    %v1092 = vshrl.u32 %v1091, 7
    %v1093 = vsub.s32 7, %v1092
    %v1094 = vrot.slane %v488, %v1093
    %v1095 = vlaneseq
    %v1096 = vshrl.u32 %v1095, 7
    %v1097 = vsub.s32 0, %v1096
    %v1098 = vrot.slane %v490, %v1097
    %v1099 = vlaneseq
    %v1100 = vshrl.u32 %v1099, 7
    %v1101 = vsub.s32 1, %v1100
    %v1102 = vrot.slane %v490, %v1101
    %v1103 = vlaneseq
    %v1104 = vshrl.u32 %v1103, 7
    %v1105 = vsub.s32 2, %v1104
    %v1106 = vrot.slane %v490, %v1105
    %v1107 = vlaneseq
    %v1108 = vshrl.u32 %v1107, 7
    %v1109 = vsub.s32 3, %v1108
    %v1110 = vrot.slane %v490, %v1109
    %v1111 = vlaneseq
    %v1112 = vshrl.u32 %v1111, 7
    %v1113 = vsub.s32 4, %v1112
    %v1114 = vrot.slane %v490, %v1113
    %v1115 = vlaneseq
    %v1116 = vshrl.u32 %v1115, 7
    %v1117 = vsub.s32 5, %v1116
    %v1118 = vrot.slane %v490, %v1117
    %v1119 = vlaneseq
    %v1120 = vshrl.u32 %v1119, 7
    %v1121 = vsub.s32 6, %v1120
    %v1122 = vrot.slane %v490, %v1121
    %v1123 = vlaneseq
    %v1124 = vshrl.u32 %v1123, 7
    %v1125 = vsub.s32 7, %v1124
    %v1126 = vrot.slane %v490, %v1125
    %v1127 = vlaneseq
    %v1128 = vshrl.u32 %v1127, 7
    %v1129 = vsub.s32 0, %v1128
    %v1130 = vrot.slane %v492, %v1129
    %v1131 = vlaneseq
    %v1132 = vshrl.u32 %v1131, 7
    %v1133 = vsub.s32 1, %v1132
    %v1134 = vrot.slane %v492, %v1133
    %v1135 = vlaneseq
    %v1136 = vshrl.u32 %v1135, 7
    %v1137 = vsub.s32 2, %v1136
    %v1138 = vrot.slane %v492, %v1137
    %v1139 = vlaneseq
    %v1140 = vshrl.u32 %v1139, 7
    %v1141 = vsub.s32 3, %v1140
    %v1142 = vrot.slane %v492, %v1141
    %v1143 = vlaneseq
    %v1144 = vshrl.u32 %v1143, 7
    %v1145 = vsub.s32 4, %v1144
    %v1146 = vrot.slane %v492, %v1145
    %v1147 = vlaneseq
    %v1148 = vshrl.u32 %v1147, 7
    %v1149 = vsub.s32 5, %v1148
    %v1150 = vrot.slane %v492, %v1149
    %v1151 = vlaneseq
    %v1152 = vshrl.u32 %v1151, 7
    %v1153 = vsub.s32 6, %v1152
    %v1154 = vrot.slane %v492, %v1153
    %v1155 = vlaneseq
    %v1156 = vshrl.u32 %v1155, 7
    %v1157 = vsub.s32 7, %v1156
    %v1158 = vrot.slane %v492, %v1157
    %v1159 = vlaneseq
    %v1160 = vshrl.u32 %v1159, 7
    %v1161 = vsub.s32 0, %v1160
    %v1162 = vrot.slane %v494, %v1161
    %v1163 = vlaneseq
    %v1164 = vshrl.u32 %v1163, 7
    %v1165 = vsub.s32 1, %v1164
    %v1166 = vrot.slane %v494, %v1165
    %v1167 = vlaneseq
    %v1168 = vshrl.u32 %v1167, 7
    %v1169 = vsub.s32 2, %v1168
    %v1170 = vrot.slane %v494, %v1169
    %v1171 = vlaneseq
    %v1172 = vshrl.u32 %v1171, 7
    %v1173 = vsub.s32 3, %v1172
    %v1174 = vrot.slane %v494, %v1173
    %v1175 = vlaneseq
    %v1176 = vshrl.u32 %v1175, 7
    %v1177 = vsub.s32 4, %v1176
    %v1178 = vrot.slane %v494, %v1177
    %v1179 = vlaneseq
    %v1180 = vshrl.u32 %v1179, 7
    %v1181 = vsub.s32 5, %v1180
    %v1182 = vrot.slane %v494, %v1181
    %v1183 = vlaneseq
    %v1184 = vshrl.u32 %v1183, 7
    %v1185 = vsub.s32 6, %v1184
    %v1186 = vrot.slane %v494, %v1185
    %v1187 = vlaneseq
    %v1188 = vshrl.u32 %v1187, 7
    %v1189 = vsub.s32 7, %v1188
    %v1190 = vrot.slane %v494, %v1189
    %v1191 = vlaneseq
    %v1192 = vshrl.u32 %v1191, 7
    %v1193 = vsub.s32 0, %v1192
    %v1194 = vrot.slane %v496, %v1193
    %v1195 = vlaneseq
    %v1196 = vshrl.u32 %v1195, 7
    %v1197 = vsub.s32 1, %v1196
    %v1198 = vrot.slane %v496, %v1197
    %v1199 = vlaneseq
    %v1200 = vshrl.u32 %v1199, 7
    %v1201 = vsub.s32 2, %v1200
    %v1202 = vrot.slane %v496, %v1201
    %v1203 = vlaneseq
    %v1204 = vshrl.u32 %v1203, 7
    %v1205 = vsub.s32 3, %v1204
    %v1206 = vrot.slane %v496, %v1205
    %v1207 = vlaneseq
    %v1208 = vshrl.u32 %v1207, 7
    %v1209 = vsub.s32 4, %v1208
    %v1210 = vrot.slane %v496, %v1209
    %v1211 = vlaneseq
    %v1212 = vshrl.u32 %v1211, 7
    %v1213 = vsub.s32 5, %v1212
    %v1214 = vrot.slane %v496, %v1213
    %v1215 = vlaneseq
    %v1216 = vshrl.u32 %v1215, 7
    %v1217 = vsub.s32 6, %v1216
    %v1218 = vrot.slane %v496, %v1217
    %v1219 = vlaneseq
    %v1220 = vshrl.u32 %v1219, 7
    %v1221 = vsub.s32 7, %v1220
    %v1222 = vrot.slane %v496, %v1221
    %v1223 = vlaneseq
    %v1224 = vshrl.u32 %v1223, 7
    %v1225 = vsub.s32 0, %v1224
    %v1226 = vrot.slane %v498, %v1225
    %v1227 = vlaneseq
    %v1228 = vshrl.u32 %v1227, 7
    %v1229 = vsub.s32 1, %v1228
    %v1230 = vrot.slane %v498, %v1229
    %v1231 = vlaneseq
    %v1232 = vshrl.u32 %v1231, 7
    %v1233 = vsub.s32 2, %v1232
    %v1234 = vrot.slane %v498, %v1233
    %v1235 = vlaneseq
    %v1236 = vshrl.u32 %v1235, 7
    %v1237 = vsub.s32 3, %v1236
    %v1238 = vrot.slane %v498, %v1237
    %v1239 = vlaneseq
    %v1240 = vshrl.u32 %v1239, 7
    %v1241 = vsub.s32 4, %v1240
    %v1242 = vrot.slane %v498, %v1241
    %v1243 = vlaneseq
    %v1244 = vshrl.u32 %v1243, 7
    %v1245 = vsub.s32 5, %v1244
    %v1246 = vrot.slane %v498, %v1245
    %v1247 = vlaneseq
    %v1248 = vshrl.u32 %v1247, 7
    %v1249 = vsub.s32 6, %v1248
    %v1250 = vrot.slane %v498, %v1249
    %v1251 = vlaneseq
    %v1252 = vshrl.u32 %v1251, 7
    %v1253 = vsub.s32 7, %v1252
    %v1254 = vrot.slane %v498, %v1253
    %v1255 = vlaneseq
    %v1256 = vshrl.u32 %v1255, 7
    %v1257 = vsub.s32 0, %v1256
    %v1258 = vrot.slane %v500, %v1257
    %v1259 = vlaneseq
    %v1260 = vshrl.u32 %v1259, 7
    %v1261 = vsub.s32 1, %v1260
    %v1262 = vrot.slane %v500, %v1261
    %v1263 = vlaneseq
    %v1264 = vshrl.u32 %v1263, 7
    %v1265 = vsub.s32 2, %v1264
    %v1266 = vrot.slane %v500, %v1265
    %v1267 = vlaneseq
    %v1268 = vshrl.u32 %v1267, 7
    %v1269 = vsub.s32 3, %v1268
    %v1270 = vrot.slane %v500, %v1269
    %v1271 = vlaneseq
    %v1272 = vshrl.u32 %v1271, 7
    %v1273 = vsub.s32 4, %v1272
    %v1274 = vrot.slane %v500, %v1273
    %v1275 = vlaneseq
    %v1276 = vshrl.u32 %v1275, 7
    %v1277 = vsub.s32 5, %v1276
    %v1278 = vrot.slane %v500, %v1277
    %v1279 = vlaneseq
    %v1280 = vshrl.u32 %v1279, 7
    %v1281 = vsub.s32 6, %v1280
    %v1282 = vrot.slane %v500, %v1281
    %v1283 = vlaneseq
    %v1284 = vshrl.u32 %v1283, 7
    %v1285 = vsub.s32 7, %v1284
    %v1286 = vrot.slane %v500, %v1285
    %v1287 = vlaneseq
    %v1288 = vshrl.u32 %v1287, 7
    %v1289 = vsub.s32 0, %v1288
    %v1290 = vrot.slane %v502, %v1289
    %v1291 = vlaneseq
    %v1292 = vshrl.u32 %v1291, 7
    %v1293 = vsub.s32 1, %v1292
    %v1294 = vrot.slane %v502, %v1293
    %v1295 = vlaneseq
    %v1296 = vshrl.u32 %v1295, 7
    %v1297 = vsub.s32 2, %v1296
    %v1298 = vrot.slane %v502, %v1297
    %v1299 = vlaneseq
    %v1300 = vshrl.u32 %v1299, 7
    %v1301 = vsub.s32 3, %v1300
    %v1302 = vrot.slane %v502, %v1301
    %v1303 = vlaneseq
    %v1304 = vshrl.u32 %v1303, 7
    %v1305 = vsub.s32 4, %v1304
    %v1306 = vrot.slane %v502, %v1305
    %v1307 = vlaneseq
    %v1308 = vshrl.u32 %v1307, 7
    %v1309 = vsub.s32 5, %v1308
    %v1310 = vrot.slane %v502, %v1309
    %v1311 = vlaneseq
    %v1312 = vshrl.u32 %v1311, 7
    %v1313 = vsub.s32 6, %v1312
    %v1314 = vrot.slane %v502, %v1313
    %v1315 = vlaneseq
    %v1316 = vshrl.u32 %v1315, 7
    %v1317 = vsub.s32 7, %v1316
    %v1318 = vrot.slane %v502, %v1317
    %v1319 = vlaneseq
    %v1320 = vshrl.u32 %v1319, 7
    %v1321 = vsub.s32 0, %v1320
    %v1322 = vrot.slane %v504, %v1321
    %v1323 = vlaneseq
    %v1324 = vshrl.u32 %v1323, 7
    %v1325 = vsub.s32 1, %v1324
    %v1326 = vrot.slane %v504, %v1325
    %v1327 = vlaneseq
    %v1328 = vshrl.u32 %v1327, 7
    %v1329 = vsub.s32 2, %v1328
    %v1330 = vrot.slane %v504, %v1329
    %v1331 = vlaneseq
    %v1332 = vshrl.u32 %v1331, 7
    %v1333 = vsub.s32 3, %v1332
    %v1334 = vrot.slane %v504, %v1333
    %v1335 = vlaneseq
    %v1336 = vshrl.u32 %v1335, 7
    %v1337 = vsub.s32 4, %v1336
    %v1338 = vrot.slane %v504, %v1337
    %v1339 = vlaneseq
    %v1340 = vshrl.u32 %v1339, 7
    %v1341 = vsub.s32 5, %v1340
    %v1342 = vrot.slane %v504, %v1341
    %v1343 = vlaneseq
    %v1344 = vshrl.u32 %v1343, 7
    %v1345 = vsub.s32 6, %v1344
    %v1346 = vrot.slane %v504, %v1345
    %v1347 = vlaneseq
    %v1348 = vshrl.u32 %v1347, 7
    %v1349 = vsub.s32 7, %v1348
    %v1350 = vrot.slane %v504, %v1349
    %v1351 = vlaneseq
    %v1352 = vshrl.u32 %v1351, 7
    %v1353 = vsub.s32 0, %v1352
    %v1354 = vrot.slane %v506, %v1353
    %v1355 = vlaneseq
    %v1356 = vshrl.u32 %v1355, 7
    %v1357 = vsub.s32 1, %v1356
    %v1358 = vrot.slane %v506, %v1357
    %v1359 = vlaneseq
    %v1360 = vshrl.u32 %v1359, 7
    %v1361 = vsub.s32 2, %v1360
    %v1362 = vrot.slane %v506, %v1361
    %v1363 = vlaneseq
    %v1364 = vshrl.u32 %v1363, 7
    %v1365 = vsub.s32 3, %v1364
    %v1366 = vrot.slane %v506, %v1365
    %v1367 = vlaneseq
    %v1368 = vshrl.u32 %v1367, 7
    %v1369 = vsub.s32 4, %v1368
    %v1370 = vrot.slane %v506, %v1369
    %v1371 = vlaneseq
    %v1372 = vshrl.u32 %v1371, 7
    %v1373 = vsub.s32 5, %v1372
    %v1374 = vrot.slane %v506, %v1373
    %v1375 = vlaneseq
    %v1376 = vshrl.u32 %v1375, 7
    %v1377 = vsub.s32 6, %v1376
    %v1378 = vrot.slane %v506, %v1377
    %v1379 = vlaneseq
    %v1380 = vshrl.u32 %v1379, 7
    %v1381 = vsub.s32 7, %v1380
    %v1382 = vrot.slane %v506, %v1381
    %v1383 = vlaneseq
    %v1384 = vshrl.u32 %v1383, 7
    %v1385 = vsub.s32 0, %v1384
    %v1386 = vrot.slane %v508, %v1385
    %v1387 = vlaneseq
    %v1388 = vshrl.u32 %v1387, 7
    %v1389 = vsub.s32 1, %v1388
    %v1390 = vrot.slane %v508, %v1389
    %v1391 = vlaneseq
    %v1392 = vshrl.u32 %v1391, 7
    %v1393 = vsub.s32 2, %v1392
    %v1394 = vrot.slane %v508, %v1393
    %v1395 = vlaneseq
    %v1396 = vshrl.u32 %v1395, 7
    %v1397 = vsub.s32 3, %v1396
    %v1398 = vrot.slane %v508, %v1397
    %v1399 = vlaneseq
    %v1400 = vshrl.u32 %v1399, 7
    %v1401 = vsub.s32 4, %v1400
    %v1402 = vrot.slane %v508, %v1401
    %v1403 = vlaneseq
    %v1404 = vshrl.u32 %v1403, 7
    %v1405 = vsub.s32 5, %v1404
    %v1406 = vrot.slane %v508, %v1405
    %v1407 = vlaneseq
    %v1408 = vshrl.u32 %v1407, 7
    %v1409 = vsub.s32 6, %v1408
    %v1410 = vrot.slane %v508, %v1409
    %v1411 = vlaneseq
    %v1412 = vshrl.u32 %v1411, 7
    %v1413 = vsub.s32 7, %v1412
    %v1414 = vrot.slane %v508, %v1413
    %v1415 = vlaneseq
    %v1416 = vshrl.u32 %v1415, 7
    %v1417 = vsub.s32 0, %v1416
    %v1418 = vrot.slane %v510, %v1417
    %v1419 = vlaneseq
    %v1420 = vshrl.u32 %v1419, 7
    %v1421 = vsub.s32 1, %v1420
    %v1422 = vrot.slane %v510, %v1421
    %v1423 = vlaneseq
    %v1424 = vshrl.u32 %v1423, 7
    %v1425 = vsub.s32 2, %v1424
    %v1426 = vrot.slane %v510, %v1425
    %v1427 = vlaneseq
    %v1428 = vshrl.u32 %v1427, 7
    %v1429 = vsub.s32 3, %v1428
    %v1430 = vrot.slane %v510, %v1429
    %v1431 = vlaneseq
    %v1432 = vshrl.u32 %v1431, 7
    %v1433 = vsub.s32 4, %v1432
    %v1434 = vrot.slane %v510, %v1433
    %v1435 = vlaneseq
    %v1436 = vshrl.u32 %v1435, 7
    %v1437 = vsub.s32 5, %v1436
    %v1438 = vrot.slane %v510, %v1437
    %v1439 = vlaneseq
    %v1440 = vshrl.u32 %v1439, 7
    %v1441 = vsub.s32 6, %v1440
    %v1442 = vrot.slane %v510, %v1441
    %v1443 = vlaneseq
    %v1444 = vshrl.u32 %v1443, 7
    %v1445 = vsub.s32 7, %v1444
    %v1446 = vrot.slane %v510, %v1445
    %v1447 = vlaneseq
    %v1448 = vshrl.u32 %v1447, 7
    %v1449 = vsub.s32 0, %v1448
    %v1450 = vrot.slane %v512, %v1449
    %v1451 = vlaneseq
    %v1452 = vshrl.u32 %v1451, 7
    %v1453 = vsub.s32 1, %v1452
    %v1454 = vrot.slane %v512, %v1453
    %v1455 = vlaneseq
    %v1456 = vshrl.u32 %v1455, 7
    %v1457 = vsub.s32 2, %v1456
    %v1458 = vrot.slane %v512, %v1457
    %v1459 = vlaneseq
    %v1460 = vshrl.u32 %v1459, 7
    %v1461 = vsub.s32 3, %v1460
    %v1462 = vrot.slane %v512, %v1461
    %v1463 = vlaneseq
    %v1464 = vshrl.u32 %v1463, 7
    %v1465 = vsub.s32 4, %v1464
    %v1466 = vrot.slane %v512, %v1465
    %v1467 = vlaneseq
    %v1468 = vshrl.u32 %v1467, 7
    %v1469 = vsub.s32 5, %v1468
    %v1470 = vrot.slane %v512, %v1469
    %v1471 = vlaneseq
    %v1472 = vshrl.u32 %v1471, 7
    %v1473 = vsub.s32 6, %v1472
    %v1474 = vrot.slane %v512, %v1473
    %v1475 = vlaneseq
    %v1476 = vshrl.u32 %v1475, 7
    %v1477 = vsub.s32 7, %v1476
    %v1478 = vrot.slane %v512, %v1477
    %v1479 = vlaneseq
    %v1480 = vshrl.u32 %v1479, 7
    %v1481 = vsub.s32 0, %v1480
    %v1482 = vrot.slane %v514, %v1481
    %v1483 = vlaneseq
    %v1484 = vshrl.u32 %v1483, 7
    %v1485 = vsub.s32 1, %v1484
    %v1486 = vrot.slane %v514, %v1485
    %v1487 = vlaneseq
    %v1488 = vshrl.u32 %v1487, 7
    %v1489 = vsub.s32 2, %v1488
    %v1490 = vrot.slane %v514, %v1489
    %v1491 = vlaneseq
    %v1492 = vshrl.u32 %v1491, 7
    %v1493 = vsub.s32 3, %v1492
    %v1494 = vrot.slane %v514, %v1493
    %v1495 = vlaneseq
    %v1496 = vshrl.u32 %v1495, 7
    %v1497 = vsub.s32 4, %v1496
    %v1498 = vrot.slane %v514, %v1497
    %v1499 = vlaneseq
    %v1500 = vshrl.u32 %v1499, 7
    %v1501 = vsub.s32 5, %v1500
    %v1502 = vrot.slane %v514, %v1501
    %v1503 = vlaneseq
    %v1504 = vshrl.u32 %v1503, 7
    %v1505 = vsub.s32 6, %v1504
    %v1506 = vrot.slane %v514, %v1505
    %v1507 = vlaneseq
    %v1508 = vshrl.u32 %v1507, 7
    %v1509 = vsub.s32 7, %v1508
    %v1510 = vrot.slane %v514, %v1509
    %v1511 = vlaneseq
    %v1512 = vshrl.u32 %v1511, 7
    %v1513 = vsub.s32 0, %v1512
    %v1514 = vrot.slane %v516, %v1513
    %v1515 = vlaneseq
    %v1516 = vshrl.u32 %v1515, 7
    %v1517 = vsub.s32 1, %v1516
    %v1518 = vrot.slane %v516, %v1517
    %v1519 = vlaneseq
    %v1520 = vshrl.u32 %v1519, 7
    %v1521 = vsub.s32 2, %v1520
    %v1522 = vrot.slane %v516, %v1521
    %v1523 = vlaneseq
    %v1524 = vshrl.u32 %v1523, 7
    %v1525 = vsub.s32 3, %v1524
    %v1526 = vrot.slane %v516, %v1525
    %v1527 = vlaneseq
    %v1528 = vshrl.u32 %v1527, 7
    %v1529 = vsub.s32 4, %v1528
    %v1530 = vrot.slane %v516, %v1529
    %v1531 = vlaneseq
    %v1532 = vshrl.u32 %v1531, 7
    %v1533 = vsub.s32 5, %v1532
    %v1534 = vrot.slane %v516, %v1533
    %v1535 = vlaneseq
    %v1536 = vshrl.u32 %v1535, 7
    %v1537 = vsub.s32 6, %v1536
    %v1538 = vrot.slane %v516, %v1537
    %v1539 = vlaneseq
    %v1540 = vshrl.u32 %v1539, 7
    %v1541 = vsub.s32 7, %v1540
    %v1542 = vrot.slane %v516, %v1541
    %v1543 = vlaneseq
    %v1544 = vshrl.u32 %v1543, 7
    %v1545 = vsub.s32 0, %v1544
    %v1546 = vrot.slane %v518, %v1545
    %v1547 = vlaneseq
    %v1548 = vshrl.u32 %v1547, 7
    %v1549 = vsub.s32 1, %v1548
    %v1550 = vrot.slane %v518, %v1549
    %v1551 = vlaneseq
    %v1552 = vshrl.u32 %v1551, 7
    %v1553 = vsub.s32 2, %v1552
    %v1554 = vrot.slane %v518, %v1553
    %v1555 = vlaneseq
    %v1556 = vshrl.u32 %v1555, 7
    %v1557 = vsub.s32 3, %v1556
    %v1558 = vrot.slane %v518, %v1557
    %v1559 = vlaneseq
    %v1560 = vshrl.u32 %v1559, 7
    %v1561 = vsub.s32 4, %v1560
    %v1562 = vrot.slane %v518, %v1561
    %v1563 = vlaneseq
    %v1564 = vshrl.u32 %v1563, 7
    %v1565 = vsub.s32 5, %v1564
    %v1566 = vrot.slane %v518, %v1565
    %v1567 = vlaneseq
    %v1568 = vshrl.u32 %v1567, 7
    %v1569 = vsub.s32 6, %v1568
    %v1570 = vrot.slane %v518, %v1569
    %v1571 = vlaneseq
    %v1572 = vshrl.u32 %v1571, 7
    %v1573 = vsub.s32 7, %v1572
    %v1574 = vrot.slane %v518, %v1573
    %v1575 = vcombine.low %v554, %v558
    %v1576 = vcombine.low %v562, %v566
    %v1577 = vcombine.low %v570, %v574
    %v1578 = vcombine.low %v578, %v582
    %v1580 = vunpack.c.l.s4 1966171168
    %v1581 = vunpack.c.0.s8 %v1580
    %v1582 = vlaneseq
    %v1583 = vshrl.u32 %v1582, 7
    %v1584 = vsub.s32 %v1581, %v1583
    %v1585 = vrot.slane %v1575, %v1584
    %v1587 = vunpack.c.l.s4 1966171168
    %v1588 = vunpack.c.0.s8 %v1587
    %v1589 = vlaneseq
    %v1590 = vshrl.u32 %v1589, 7
    %v1591 = vsub.s32 %v1588, %v1590
    %v1592 = vrot.slane %v1576, %v1591
    %v1594 = vunpack.c.l.s4 1966171168
    %v1595 = vunpack.c.0.s8 %v1594
    %v1596 = vlaneseq
    %v1597 = vshrl.u32 %v1596, 7
    %v1598 = vsub.s32 %v1595, %v1597
    %v1599 = vrot.slane %v1577, %v1598
    %v1601 = vunpack.c.l.s4 1966171168
    %v1602 = vunpack.c.0.s8 %v1601
    %v1603 = vlaneseq
    %v1604 = vshrl.u32 %v1603, 7
    %v1605 = vsub.s32 %v1602, %v1604
    %v1606 = vrot.slane %v1578, %v1605
    %v1607 = vcombine.low %v1585, %v1592
    %v1608 = vcombine.low %v1599, %v1606
    %v1610 = vunpack.c.l.s4 1966171168
    %v1611 = vunpack.c.0.s8 %v1610
    %v1612 = vlaneseq
    %v1613 = vshrl.u32 %v1612, 7
    %v1614 = vsub.s32 %v1611, %v1613
    %v1615 = vrot.slane %v1607, %v1614
    %v1617 = vunpack.c.l.s4 1966171168
    %v1618 = vunpack.c.0.s8 %v1617
    %v1619 = vlaneseq
    %v1620 = vshrl.u32 %v1619, 7
    %v1621 = vsub.s32 %v1618, %v1620
    %v1622 = vrot.slane %v1608, %v1621
    %v1623 = vcombine.low %v1615, %v1622
    %v1624 = vcombine.low %v586, %v590
    %v1625 = vcombine.low %v594, %v598
    %v1626 = vcombine.low %v602, %v606
    %v1627 = vcombine.low %v610, %v614
    %v1629 = vunpack.c.l.s4 1966171168
    %v1630 = vunpack.c.0.s8 %v1629
    %v1631 = vlaneseq
    %v1632 = vshrl.u32 %v1631, 7
    %v1633 = vsub.s32 %v1630, %v1632
    %v1634 = vrot.slane %v1624, %v1633
    %v1636 = vunpack.c.l.s4 1966171168
    %v1637 = vunpack.c.0.s8 %v1636
    %v1638 = vlaneseq
    %v1639 = vshrl.u32 %v1638, 7
    %v1640 = vsub.s32 %v1637, %v1639
    %v1641 = vrot.slane %v1625, %v1640
    %v1643 = vunpack.c.l.s4 1966171168
    %v1644 = vunpack.c.0.s8 %v1643
    %v1645 = vlaneseq
    %v1646 = vshrl.u32 %v1645, 7
    %v1647 = vsub.s32 %v1644, %v1646
    %v1648 = vrot.slane %v1626, %v1647
    %v1650 = vunpack.c.l.s4 1966171168
    %v1651 = vunpack.c.0.s8 %v1650
    %v1652 = vlaneseq
    %v1653 = vshrl.u32 %v1652, 7
    %v1654 = vsub.s32 %v1651, %v1653
    %v1655 = vrot.slane %v1627, %v1654
    %v1656 = vcombine.low %v1634, %v1641
    %v1657 = vcombine.low %v1648, %v1655
    %v1659 = vunpack.c.l.s4 1966171168
    %v1660 = vunpack.c.0.s8 %v1659
    %v1661 = vlaneseq
    %v1662 = vshrl.u32 %v1661, 7
    %v1663 = vsub.s32 %v1660, %v1662
    %v1664 = vrot.slane %v1656, %v1663
    %v1666 = vunpack.c.l.s4 1966171168
    %v1667 = vunpack.c.0.s8 %v1666
    %v1668 = vlaneseq
    %v1669 = vshrl.u32 %v1668, 7
    %v1670 = vsub.s32 %v1667, %v1669
    %v1671 = vrot.slane %v1657, %v1670
    %v1672 = vcombine.low %v1664, %v1671
    %v1673 = vcombine.low %v618, %v622
    %v1674 = vcombine.low %v626, %v630
    %v1675 = vcombine.low %v634, %v638
    %v1676 = vcombine.low %v642, %v646
    %v1678 = vunpack.c.l.s4 1966171168
    %v1679 = vunpack.c.0.s8 %v1678
    %v1680 = vlaneseq
    %v1681 = vshrl.u32 %v1680, 7
    %v1682 = vsub.s32 %v1679, %v1681
    %v1683 = vrot.slane %v1673, %v1682
    %v1685 = vunpack.c.l.s4 1966171168
    %v1686 = vunpack.c.0.s8 %v1685
    %v1687 = vlaneseq
    %v1688 = vshrl.u32 %v1687, 7
    %v1689 = vsub.s32 %v1686, %v1688
    %v1690 = vrot.slane %v1674, %v1689
    %v1692 = vunpack.c.l.s4 1966171168
    %v1693 = vunpack.c.0.s8 %v1692
    %v1694 = vlaneseq
    %v1695 = vshrl.u32 %v1694, 7
    %v1696 = vsub.s32 %v1693, %v1695
    %v1697 = vrot.slane %v1675, %v1696
    %v1699 = vunpack.c.l.s4 1966171168
    %v1700 = vunpack.c.0.s8 %v1699
    %v1701 = vlaneseq
    %v1702 = vshrl.u32 %v1701, 7
    %v1703 = vsub.s32 %v1700, %v1702
    %v1704 = vrot.slane %v1676, %v1703
    %v1705 = vcombine.low %v1683, %v1690
    %v1706 = vcombine.low %v1697, %v1704
    %v1708 = vunpack.c.l.s4 1966171168
    %v1709 = vunpack.c.0.s8 %v1708
    %v1710 = vlaneseq
    %v1711 = vshrl.u32 %v1710, 7
    %v1712 = vsub.s32 %v1709, %v1711
    %v1713 = vrot.slane %v1705, %v1712
    %v1715 = vunpack.c.l.s4 1966171168
    %v1716 = vunpack.c.0.s8 %v1715
    %v1717 = vlaneseq
    %v1718 = vshrl.u32 %v1717, 7
    %v1719 = vsub.s32 %v1716, %v1718
    %v1720 = vrot.slane %v1706, %v1719
    %v1721 = vcombine.low %v1713, %v1720
    %v1722 = vcombine.low %v650, %v654
    %v1723 = vcombine.low %v658, %v662
    %v1724 = vcombine.low %v666, %v670
    %v1725 = vcombine.low %v674, %v678
    %v1727 = vunpack.c.l.s4 1966171168
    %v1728 = vunpack.c.0.s8 %v1727
    %v1729 = vlaneseq
    %v1730 = vshrl.u32 %v1729, 7
    %v1731 = vsub.s32 %v1728, %v1730
    %v1732 = vrot.slane %v1722, %v1731
    %v1734 = vunpack.c.l.s4 1966171168
    %v1735 = vunpack.c.0.s8 %v1734
    %v1736 = vlaneseq
    %v1737 = vshrl.u32 %v1736, 7
    %v1738 = vsub.s32 %v1735, %v1737
    %v1739 = vrot.slane %v1723, %v1738
    %v1741 = vunpack.c.l.s4 1966171168
    %v1742 = vunpack.c.0.s8 %v1741
    %v1743 = vlaneseq
    %v1744 = vshrl.u32 %v1743, 7
    %v1745 = vsub.s32 %v1742, %v1744
    %v1746 = vrot.slane %v1724, %v1745
    %v1748 = vunpack.c.l.s4 1966171168
    %v1749 = vunpack.c.0.s8 %v1748
    %v1750 = vlaneseq
    %v1751 = vshrl.u32 %v1750, 7
    %v1752 = vsub.s32 %v1749, %v1751
    %v1753 = vrot.slane %v1725, %v1752
    %v1754 = vcombine.low %v1732, %v1739
    %v1755 = vcombine.low %v1746, %v1753
    %v1757 = vunpack.c.l.s4 1966171168
    %v1758 = vunpack.c.0.s8 %v1757
    %v1759 = vlaneseq
    %v1760 = vshrl.u32 %v1759, 7
    %v1761 = vsub.s32 %v1758, %v1760
    %v1762 = vrot.slane %v1754, %v1761
    %v1764 = vunpack.c.l.s4 1966171168
    %v1765 = vunpack.c.0.s8 %v1764
    %v1766 = vlaneseq
    %v1767 = vshrl.u32 %v1766, 7
    %v1768 = vsub.s32 %v1765, %v1767
    %v1769 = vrot.slane %v1755, %v1768
    %v1770 = vcombine.low %v1762, %v1769
    %v1771 = vcombine.low %v682, %v686
    %v1772 = vcombine.low %v690, %v694
    %v1773 = vcombine.low %v698, %v702
    %v1774 = vcombine.low %v706, %v710
    %v1776 = vunpack.c.l.s4 1966171168
    %v1777 = vunpack.c.0.s8 %v1776
    %v1778 = vlaneseq
    %v1779 = vshrl.u32 %v1778, 7
    %v1780 = vsub.s32 %v1777, %v1779
    %v1781 = vrot.slane %v1771, %v1780
    %v1783 = vunpack.c.l.s4 1966171168
    %v1784 = vunpack.c.0.s8 %v1783
    %v1785 = vlaneseq
    %v1786 = vshrl.u32 %v1785, 7
    %v1787 = vsub.s32 %v1784, %v1786
    %v1788 = vrot.slane %v1772, %v1787
    %v1790 = vunpack.c.l.s4 1966171168
    %v1791 = vunpack.c.0.s8 %v1790
    %v1792 = vlaneseq
    %v1793 = vshrl.u32 %v1792, 7
    %v1794 = vsub.s32 %v1791, %v1793
    %v1795 = vrot.slane %v1773, %v1794
    %v1797 = vunpack.c.l.s4 1966171168
    %v1798 = vunpack.c.0.s8 %v1797
    %v1799 = vlaneseq
    %v1800 = vshrl.u32 %v1799, 7
    %v1801 = vsub.s32 %v1798, %v1800
    %v1802 = vrot.slane %v1774, %v1801
    %v1803 = vcombine.low %v1781, %v1788
    %v1804 = vcombine.low %v1795, %v1802
    %v1806 = vunpack.c.l.s4 1966171168
    %v1807 = vunpack.c.0.s8 %v1806
    %v1808 = vlaneseq
    %v1809 = vshrl.u32 %v1808, 7
    %v1810 = vsub.s32 %v1807, %v1809
    %v1811 = vrot.slane %v1803, %v1810
    %v1813 = vunpack.c.l.s4 1966171168
    %v1814 = vunpack.c.0.s8 %v1813
    %v1815 = vlaneseq
    %v1816 = vshrl.u32 %v1815, 7
    %v1817 = vsub.s32 %v1814, %v1816
    %v1818 = vrot.slane %v1804, %v1817
    %v1819 = vcombine.low %v1811, %v1818
    %v1820 = vcombine.low %v714, %v718
    %v1821 = vcombine.low %v722, %v726
    %v1822 = vcombine.low %v730, %v734
    %v1823 = vcombine.low %v738, %v742
    %v1825 = vunpack.c.l.s4 1966171168
    %v1826 = vunpack.c.0.s8 %v1825
    %v1827 = vlaneseq
    %v1828 = vshrl.u32 %v1827, 7
    %v1829 = vsub.s32 %v1826, %v1828
    %v1830 = vrot.slane %v1820, %v1829
    %v1832 = vunpack.c.l.s4 1966171168
    %v1833 = vunpack.c.0.s8 %v1832
    %v1834 = vlaneseq
    %v1835 = vshrl.u32 %v1834, 7
    %v1836 = vsub.s32 %v1833, %v1835
    %v1837 = vrot.slane %v1821, %v1836
    %v1839 = vunpack.c.l.s4 1966171168
    %v1840 = vunpack.c.0.s8 %v1839
    %v1841 = vlaneseq
    %v1842 = vshrl.u32 %v1841, 7
    %v1843 = vsub.s32 %v1840, %v1842
    %v1844 = vrot.slane %v1822, %v1843
    %v1846 = vunpack.c.l.s4 1966171168
    %v1847 = vunpack.c.0.s8 %v1846
    %v1848 = vlaneseq
    %v1849 = vshrl.u32 %v1848, 7
    %v1850 = vsub.s32 %v1847, %v1849
    %v1851 = vrot.slane %v1823, %v1850
    %v1852 = vcombine.low %v1830, %v1837
    %v1853 = vcombine.low %v1844, %v1851
    %v1855 = vunpack.c.l.s4 1966171168
    %v1856 = vunpack.c.0.s8 %v1855
    %v1857 = vlaneseq
    %v1858 = vshrl.u32 %v1857, 7
    %v1859 = vsub.s32 %v1856, %v1858
    %v1860 = vrot.slane %v1852, %v1859
    %v1862 = vunpack.c.l.s4 1966171168
    %v1863 = vunpack.c.0.s8 %v1862
    %v1864 = vlaneseq
    %v1865 = vshrl.u32 %v1864, 7
    %v1866 = vsub.s32 %v1863, %v1865
    %v1867 = vrot.slane %v1853, %v1866
    %v1868 = vcombine.low %v1860, %v1867
    %v1869 = vcombine.low %v746, %v750
    %v1870 = vcombine.low %v754, %v758
    %v1871 = vcombine.low %v762, %v766
    %v1872 = vcombine.low %v770, %v774
    %v1874 = vunpack.c.l.s4 1966171168
    %v1875 = vunpack.c.0.s8 %v1874
    %v1876 = vlaneseq
    %v1877 = vshrl.u32 %v1876, 7
    %v1878 = vsub.s32 %v1875, %v1877
    %v1879 = vrot.slane %v1869, %v1878
    %v1881 = vunpack.c.l.s4 1966171168
    %v1882 = vunpack.c.0.s8 %v1881
    %v1883 = vlaneseq
    %v1884 = vshrl.u32 %v1883, 7
    %v1885 = vsub.s32 %v1882, %v1884
    %v1886 = vrot.slane %v1870, %v1885
    %v1888 = vunpack.c.l.s4 1966171168
    %v1889 = vunpack.c.0.s8 %v1888
    %v1890 = vlaneseq
    %v1891 = vshrl.u32 %v1890, 7
    %v1892 = vsub.s32 %v1889, %v1891
    %v1893 = vrot.slane %v1871, %v1892
    %v1895 = vunpack.c.l.s4 1966171168
    %v1896 = vunpack.c.0.s8 %v1895
    %v1897 = vlaneseq
    %v1898 = vshrl.u32 %v1897, 7
    %v1899 = vsub.s32 %v1896, %v1898
    %v1900 = vrot.slane %v1872, %v1899
    %v1901 = vcombine.low %v1879, %v1886
    %v1902 = vcombine.low %v1893, %v1900
    %v1904 = vunpack.c.l.s4 1966171168
    %v1905 = vunpack.c.0.s8 %v1904
    %v1906 = vlaneseq
    %v1907 = vshrl.u32 %v1906, 7
    %v1908 = vsub.s32 %v1905, %v1907
    %v1909 = vrot.slane %v1901, %v1908
    %v1911 = vunpack.c.l.s4 1966171168
    %v1912 = vunpack.c.0.s8 %v1911
    %v1913 = vlaneseq
    %v1914 = vshrl.u32 %v1913, 7
    %v1915 = vsub.s32 %v1912, %v1914
    %v1916 = vrot.slane %v1902, %v1915
    %v1917 = vcombine.low %v1909, %v1916
    %v1918 = vcombine.low %v778, %v782
    %v1919 = vcombine.low %v786, %v790
    %v1920 = vcombine.low %v794, %v798
    %v1921 = vcombine.low %v802, %v806
    %v1923 = vunpack.c.l.s4 1966171168
    %v1924 = vunpack.c.0.s8 %v1923
    %v1925 = vlaneseq
    %v1926 = vshrl.u32 %v1925, 7
    %v1927 = vsub.s32 %v1924, %v1926
    %v1928 = vrot.slane %v1918, %v1927
    %v1930 = vunpack.c.l.s4 1966171168
    %v1931 = vunpack.c.0.s8 %v1930
    %v1932 = vlaneseq
    %v1933 = vshrl.u32 %v1932, 7
    %v1934 = vsub.s32 %v1931, %v1933
    %v1935 = vrot.slane %v1919, %v1934
    %v1937 = vunpack.c.l.s4 1966171168
    %v1938 = vunpack.c.0.s8 %v1937
    %v1939 = vlaneseq
    %v1940 = vshrl.u32 %v1939, 7
    %v1941 = vsub.s32 %v1938, %v1940
    %v1942 = vrot.slane %v1920, %v1941
    %v1944 = vunpack.c.l.s4 1966171168
    %v1945 = vunpack.c.0.s8 %v1944
    %v1946 = vlaneseq
    %v1947 = vshrl.u32 %v1946, 7
    %v1948 = vsub.s32 %v1945, %v1947
    %v1949 = vrot.slane %v1921, %v1948
    %v1950 = vcombine.low %v1928, %v1935
    %v1951 = vcombine.low %v1942, %v1949
    %v1953 = vunpack.c.l.s4 1966171168
    %v1954 = vunpack.c.0.s8 %v1953
    %v1955 = vlaneseq
    %v1956 = vshrl.u32 %v1955, 7
    %v1957 = vsub.s32 %v1954, %v1956
    %v1958 = vrot.slane %v1950, %v1957
    %v1960 = vunpack.c.l.s4 1966171168
    %v1961 = vunpack.c.0.s8 %v1960
    %v1962 = vlaneseq
    %v1963 = vshrl.u32 %v1962, 7
    %v1964 = vsub.s32 %v1961, %v1963
    %v1965 = vrot.slane %v1951, %v1964
    %v1966 = vcombine.low %v1958, %v1965
    %v1967 = vcombine.low %v810, %v814
    %v1968 = vcombine.low %v818, %v822
    %v1969 = vcombine.low %v826, %v830
    %v1970 = vcombine.low %v834, %v838
    %v1972 = vunpack.c.l.s4 1966171168
    %v1973 = vunpack.c.0.s8 %v1972
    %v1974 = vlaneseq
    %v1975 = vshrl.u32 %v1974, 7
    %v1976 = vsub.s32 %v1973, %v1975
    %v1977 = vrot.slane %v1967, %v1976
    %v1979 = vunpack.c.l.s4 1966171168
    %v1980 = vunpack.c.0.s8 %v1979
    %v1981 = vlaneseq
    %v1982 = vshrl.u32 %v1981, 7
    %v1983 = vsub.s32 %v1980, %v1982
    %v1984 = vrot.slane %v1968, %v1983
    %v1986 = vunpack.c.l.s4 1966171168
    %v1987 = vunpack.c.0.s8 %v1986
    %v1988 = vlaneseq
    %v1989 = vshrl.u32 %v1988, 7
    %v1990 = vsub.s32 %v1987, %v1989
    %v1991 = vrot.slane %v1969, %v1990
    %v1993 = vunpack.c.l.s4 1966171168
    %v1994 = vunpack.c.0.s8 %v1993
    %v1995 = vlaneseq
    %v1996 = vshrl.u32 %v1995, 7
    %v1997 = vsub.s32 %v1994, %v1996
    %v1998 = vrot.slane %v1970, %v1997
    %v1999 = vcombine.low %v1977, %v1984
    %v2000 = vcombine.low %v1991, %v1998
    %v2002 = vunpack.c.l.s4 1966171168
    %v2003 = vunpack.c.0.s8 %v2002
    %v2004 = vlaneseq
    %v2005 = vshrl.u32 %v2004, 7
    %v2006 = vsub.s32 %v2003, %v2005
    %v2007 = vrot.slane %v1999, %v2006
    %v2009 = vunpack.c.l.s4 1966171168
    %v2010 = vunpack.c.0.s8 %v2009
    %v2011 = vlaneseq
    %v2012 = vshrl.u32 %v2011, 7
    %v2013 = vsub.s32 %v2010, %v2012
    %v2014 = vrot.slane %v2000, %v2013
    %v2015 = vcombine.low %v2007, %v2014
    %v2016 = vcombine.low %v842, %v846
    %v2017 = vcombine.low %v850, %v854
    %v2018 = vcombine.low %v858, %v862
    %v2019 = vcombine.low %v866, %v870
    %v2021 = vunpack.c.l.s4 1966171168
    %v2022 = vunpack.c.0.s8 %v2021
    %v2023 = vlaneseq
    %v2024 = vshrl.u32 %v2023, 7
    %v2025 = vsub.s32 %v2022, %v2024
    %v2026 = vrot.slane %v2016, %v2025
    %v2028 = vunpack.c.l.s4 1966171168
    %v2029 = vunpack.c.0.s8 %v2028
    %v2030 = vlaneseq
    %v2031 = vshrl.u32 %v2030, 7
    %v2032 = vsub.s32 %v2029, %v2031
    %v2033 = vrot.slane %v2017, %v2032
    %v2035 = vunpack.c.l.s4 1966171168
    %v2036 = vunpack.c.0.s8 %v2035
    %v2037 = vlaneseq
    %v2038 = vshrl.u32 %v2037, 7
    %v2039 = vsub.s32 %v2036, %v2038
    %v2040 = vrot.slane %v2018, %v2039
    %v2042 = vunpack.c.l.s4 1966171168
    %v2043 = vunpack.c.0.s8 %v2042
    %v2044 = vlaneseq
    %v2045 = vshrl.u32 %v2044, 7
    %v2046 = vsub.s32 %v2043, %v2045
    %v2047 = vrot.slane %v2019, %v2046
    %v2048 = vcombine.low %v2026, %v2033
    %v2049 = vcombine.low %v2040, %v2047
    %v2051 = vunpack.c.l.s4 1966171168
    %v2052 = vunpack.c.0.s8 %v2051
    %v2053 = vlaneseq
    %v2054 = vshrl.u32 %v2053, 7
    %v2055 = vsub.s32 %v2052, %v2054
    %v2056 = vrot.slane %v2048, %v2055
    %v2058 = vunpack.c.l.s4 1966171168
    %v2059 = vunpack.c.0.s8 %v2058
    %v2060 = vlaneseq
    %v2061 = vshrl.u32 %v2060, 7
    %v2062 = vsub.s32 %v2059, %v2061
    %v2063 = vrot.slane %v2049, %v2062
    %v2064 = vcombine.low %v2056, %v2063
    %v2065 = vcombine.low %v874, %v878
    %v2066 = vcombine.low %v882, %v886
    %v2067 = vcombine.low %v890, %v894
    %v2068 = vcombine.low %v898, %v902
    %v2070 = vunpack.c.l.s4 1966171168
    %v2071 = vunpack.c.0.s8 %v2070
    %v2072 = vlaneseq
    %v2073 = vshrl.u32 %v2072, 7
    %v2074 = vsub.s32 %v2071, %v2073
    %v2075 = vrot.slane %v2065, %v2074
    %v2077 = vunpack.c.l.s4 1966171168
    %v2078 = vunpack.c.0.s8 %v2077
    %v2079 = vlaneseq
    %v2080 = vshrl.u32 %v2079, 7
    %v2081 = vsub.s32 %v2078, %v2080
    %v2082 = vrot.slane %v2066, %v2081
    %v2084 = vunpack.c.l.s4 1966171168
    %v2085 = vunpack.c.0.s8 %v2084
    %v2086 = vlaneseq
    %v2087 = vshrl.u32 %v2086, 7
    %v2088 = vsub.s32 %v2085, %v2087
    %v2089 = vrot.slane %v2067, %v2088
    %v2091 = vunpack.c.l.s4 1966171168
    %v2092 = vunpack.c.0.s8 %v2091
    %v2093 = vlaneseq
    %v2094 = vshrl.u32 %v2093, 7
    %v2095 = vsub.s32 %v2092, %v2094
    %v2096 = vrot.slane %v2068, %v2095
    %v2097 = vcombine.low %v2075, %v2082
    %v2098 = vcombine.low %v2089, %v2096
    %v2100 = vunpack.c.l.s4 1966171168
    %v2101 = vunpack.c.0.s8 %v2100
    %v2102 = vlaneseq
    %v2103 = vshrl.u32 %v2102, 7
    %v2104 = vsub.s32 %v2101, %v2103
    %v2105 = vrot.slane %v2097, %v2104
    %v2107 = vunpack.c.l.s4 1966171168
    %v2108 = vunpack.c.0.s8 %v2107
    %v2109 = vlaneseq
    %v2110 = vshrl.u32 %v2109, 7
    %v2111 = vsub.s32 %v2108, %v2110
    %v2112 = vrot.slane %v2098, %v2111
    %v2113 = vcombine.low %v2105, %v2112
    %v2114 = vcombine.low %v906, %v910
    %v2115 = vcombine.low %v914, %v918
    %v2116 = vcombine.low %v922, %v926
    %v2117 = vcombine.low %v930, %v934
    %v2119 = vunpack.c.l.s4 1966171168
    %v2120 = vunpack.c.0.s8 %v2119
    %v2121 = vlaneseq
    %v2122 = vshrl.u32 %v2121, 7
    %v2123 = vsub.s32 %v2120, %v2122
    %v2124 = vrot.slane %v2114, %v2123
    %v2126 = vunpack.c.l.s4 1966171168
    %v2127 = vunpack.c.0.s8 %v2126
    %v2128 = vlaneseq
    %v2129 = vshrl.u32 %v2128, 7
    %v2130 = vsub.s32 %v2127, %v2129
    %v2131 = vrot.slane %v2115, %v2130
    %v2133 = vunpack.c.l.s4 1966171168
    %v2134 = vunpack.c.0.s8 %v2133
    %v2135 = vlaneseq
    %v2136 = vshrl.u32 %v2135, 7
    %v2137 = vsub.s32 %v2134, %v2136
    %v2138 = vrot.slane %v2116, %v2137
    %v2140 = vunpack.c.l.s4 1966171168
    %v2141 = vunpack.c.0.s8 %v2140
    %v2142 = vlaneseq
    %v2143 = vshrl.u32 %v2142, 7
    %v2144 = vsub.s32 %v2141, %v2143
    %v2145 = vrot.slane %v2117, %v2144
    %v2146 = vcombine.low %v2124, %v2131
    %v2147 = vcombine.low %v2138, %v2145
    %v2149 = vunpack.c.l.s4 1966171168
    %v2150 = vunpack.c.0.s8 %v2149
    %v2151 = vlaneseq
    %v2152 = vshrl.u32 %v2151, 7
    %v2153 = vsub.s32 %v2150, %v2152
    %v2154 = vrot.slane %v2146, %v2153
    %v2156 = vunpack.c.l.s4 1966171168
    %v2157 = vunpack.c.0.s8 %v2156
    %v2158 = vlaneseq
    %v2159 = vshrl.u32 %v2158, 7
    %v2160 = vsub.s32 %v2157, %v2159
    %v2161 = vrot.slane %v2147, %v2160
    %v2162 = vcombine.low %v2154, %v2161
    %v2163 = vcombine.low %v938, %v942
    %v2164 = vcombine.low %v946, %v950
    %v2165 = vcombine.low %v954, %v958
    %v2166 = vcombine.low %v962, %v966
    %v2168 = vunpack.c.l.s4 1966171168
    %v2169 = vunpack.c.0.s8 %v2168
    %v2170 = vlaneseq
    %v2171 = vshrl.u32 %v2170, 7
    %v2172 = vsub.s32 %v2169, %v2171
    %v2173 = vrot.slane %v2163, %v2172
    %v2175 = vunpack.c.l.s4 1966171168
    %v2176 = vunpack.c.0.s8 %v2175
    %v2177 = vlaneseq
    %v2178 = vshrl.u32 %v2177, 7
    %v2179 = vsub.s32 %v2176, %v2178
    %v2180 = vrot.slane %v2164, %v2179
    %v2182 = vunpack.c.l.s4 1966171168
    %v2183 = vunpack.c.0.s8 %v2182
    %v2184 = vlaneseq
    %v2185 = vshrl.u32 %v2184, 7
    %v2186 = vsub.s32 %v2183, %v2185
    %v2187 = vrot.slane %v2165, %v2186
    %v2189 = vunpack.c.l.s4 1966171168
    %v2190 = vunpack.c.0.s8 %v2189
    %v2191 = vlaneseq
    %v2192 = vshrl.u32 %v2191, 7
    %v2193 = vsub.s32 %v2190, %v2192
    %v2194 = vrot.slane %v2166, %v2193
    %v2195 = vcombine.low %v2173, %v2180
    %v2196 = vcombine.low %v2187, %v2194
    %v2198 = vunpack.c.l.s4 1966171168
    %v2199 = vunpack.c.0.s8 %v2198
    %v2200 = vlaneseq
    %v2201 = vshrl.u32 %v2200, 7
    %v2202 = vsub.s32 %v2199, %v2201
    %v2203 = vrot.slane %v2195, %v2202
    %v2205 = vunpack.c.l.s4 1966171168
    %v2206 = vunpack.c.0.s8 %v2205
    %v2207 = vlaneseq
    %v2208 = vshrl.u32 %v2207, 7
    %v2209 = vsub.s32 %v2206, %v2208
    %v2210 = vrot.slane %v2196, %v2209
    %v2211 = vcombine.low %v2203, %v2210
    %v2212 = vcombine.low %v970, %v974
    %v2213 = vcombine.low %v978, %v982
    %v2214 = vcombine.low %v986, %v990
    %v2215 = vcombine.low %v994, %v998
    %v2217 = vunpack.c.l.s4 1966171168
    %v2218 = vunpack.c.0.s8 %v2217
    %v2219 = vlaneseq
    %v2220 = vshrl.u32 %v2219, 7
    %v2221 = vsub.s32 %v2218, %v2220
    %v2222 = vrot.slane %v2212, %v2221
    %v2224 = vunpack.c.l.s4 1966171168
    %v2225 = vunpack.c.0.s8 %v2224
    %v2226 = vlaneseq
    %v2227 = vshrl.u32 %v2226, 7
    %v2228 = vsub.s32 %v2225, %v2227
    %v2229 = vrot.slane %v2213, %v2228
    %v2231 = vunpack.c.l.s4 1966171168
    %v2232 = vunpack.c.0.s8 %v2231
    %v2233 = vlaneseq
    %v2234 = vshrl.u32 %v2233, 7
    %v2235 = vsub.s32 %v2232, %v2234
    %v2236 = vrot.slane %v2214, %v2235
    %v2238 = vunpack.c.l.s4 1966171168
    %v2239 = vunpack.c.0.s8 %v2238
    %v2240 = vlaneseq
    %v2241 = vshrl.u32 %v2240, 7
    %v2242 = vsub.s32 %v2239, %v2241
    %v2243 = vrot.slane %v2215, %v2242
    %v2244 = vcombine.low %v2222, %v2229
    %v2245 = vcombine.low %v2236, %v2243
    %v2247 = vunpack.c.l.s4 1966171168
    %v2248 = vunpack.c.0.s8 %v2247
    %v2249 = vlaneseq
    %v2250 = vshrl.u32 %v2249, 7
    %v2251 = vsub.s32 %v2248, %v2250
    %v2252 = vrot.slane %v2244, %v2251
    %v2254 = vunpack.c.l.s4 1966171168
    %v2255 = vunpack.c.0.s8 %v2254
    %v2256 = vlaneseq
    %v2257 = vshrl.u32 %v2256, 7
    %v2258 = vsub.s32 %v2255, %v2257
    %v2259 = vrot.slane %v2245, %v2258
    %v2260 = vcombine.low %v2252, %v2259
    %v2261 = vcombine.low %v1002, %v1006
    %v2262 = vcombine.low %v1010, %v1014
    %v2263 = vcombine.low %v1018, %v1022
    %v2264 = vcombine.low %v1026, %v1030
    %v2266 = vunpack.c.l.s4 1966171168
    %v2267 = vunpack.c.0.s8 %v2266
    %v2268 = vlaneseq
    %v2269 = vshrl.u32 %v2268, 7
    %v2270 = vsub.s32 %v2267, %v2269
    %v2271 = vrot.slane %v2261, %v2270
    %v2273 = vunpack.c.l.s4 1966171168
    %v2274 = vunpack.c.0.s8 %v2273
    %v2275 = vlaneseq
    %v2276 = vshrl.u32 %v2275, 7
    %v2277 = vsub.s32 %v2274, %v2276
    %v2278 = vrot.slane %v2262, %v2277
    %v2280 = vunpack.c.l.s4 1966171168
    %v2281 = vunpack.c.0.s8 %v2280
    %v2282 = vlaneseq
    %v2283 = vshrl.u32 %v2282, 7
    %v2284 = vsub.s32 %v2281, %v2283
    %v2285 = vrot.slane %v2263, %v2284
    %v2287 = vunpack.c.l.s4 1966171168
    %v2288 = vunpack.c.0.s8 %v2287
    %v2289 = vlaneseq
    %v2290 = vshrl.u32 %v2289, 7
    %v2291 = vsub.s32 %v2288, %v2290
    %v2292 = vrot.slane %v2264, %v2291
    %v2293 = vcombine.low %v2271, %v2278
    %v2294 = vcombine.low %v2285, %v2292
    %v2296 = vunpack.c.l.s4 1966171168
    %v2297 = vunpack.c.0.s8 %v2296
    %v2298 = vlaneseq
    %v2299 = vshrl.u32 %v2298, 7
    %v2300 = vsub.s32 %v2297, %v2299
    %v2301 = vrot.slane %v2293, %v2300
    %v2303 = vunpack.c.l.s4 1966171168
    %v2304 = vunpack.c.0.s8 %v2303
    %v2305 = vlaneseq
    %v2306 = vshrl.u32 %v2305, 7
    %v2307 = vsub.s32 %v2304, %v2306
    %v2308 = vrot.slane %v2294, %v2307
    %v2309 = vcombine.low %v2301, %v2308
    %v2310 = vcombine.low %v1034, %v1038
    %v2311 = vcombine.low %v1042, %v1046
    %v2312 = vcombine.low %v1050, %v1054
    %v2313 = vcombine.low %v1058, %v1062
    %v2315 = vunpack.c.l.s4 1966171168
    %v2316 = vunpack.c.0.s8 %v2315
    %v2317 = vlaneseq
    %v2318 = vshrl.u32 %v2317, 7
    %v2319 = vsub.s32 %v2316, %v2318
    %v2320 = vrot.slane %v2310, %v2319
    %v2322 = vunpack.c.l.s4 1966171168
    %v2323 = vunpack.c.0.s8 %v2322
    %v2324 = vlaneseq
    %v2325 = vshrl.u32 %v2324, 7
    %v2326 = vsub.s32 %v2323, %v2325
    %v2327 = vrot.slane %v2311, %v2326
    %v2329 = vunpack.c.l.s4 1966171168
    %v2330 = vunpack.c.0.s8 %v2329
    %v2331 = vlaneseq
    %v2332 = vshrl.u32 %v2331, 7
    %v2333 = vsub.s32 %v2330, %v2332
    %v2334 = vrot.slane %v2312, %v2333
    %v2336 = vunpack.c.l.s4 1966171168
    %v2337 = vunpack.c.0.s8 %v2336
    %v2338 = vlaneseq
    %v2339 = vshrl.u32 %v2338, 7
    %v2340 = vsub.s32 %v2337, %v2339
    %v2341 = vrot.slane %v2313, %v2340
    %v2342 = vcombine.low %v2320, %v2327
    %v2343 = vcombine.low %v2334, %v2341
    %v2345 = vunpack.c.l.s4 1966171168
    %v2346 = vunpack.c.0.s8 %v2345
    %v2347 = vlaneseq
    %v2348 = vshrl.u32 %v2347, 7
    %v2349 = vsub.s32 %v2346, %v2348
    %v2350 = vrot.slane %v2342, %v2349
    %v2352 = vunpack.c.l.s4 1966171168
    %v2353 = vunpack.c.0.s8 %v2352
    %v2354 = vlaneseq
    %v2355 = vshrl.u32 %v2354, 7
    %v2356 = vsub.s32 %v2353, %v2355
    %v2357 = vrot.slane %v2343, %v2356
    %v2358 = vcombine.low %v2350, %v2357
    %v2359 = vcombine.low %v1066, %v1070
    %v2360 = vcombine.low %v1074, %v1078
    %v2361 = vcombine.low %v1082, %v1086
    %v2362 = vcombine.low %v1090, %v1094
    %v2364 = vunpack.c.l.s4 1966171168
    %v2365 = vunpack.c.0.s8 %v2364
    %v2366 = vlaneseq
    %v2367 = vshrl.u32 %v2366, 7
    %v2368 = vsub.s32 %v2365, %v2367
    %v2369 = vrot.slane %v2359, %v2368
    %v2371 = vunpack.c.l.s4 1966171168
    %v2372 = vunpack.c.0.s8 %v2371
    %v2373 = vlaneseq
    %v2374 = vshrl.u32 %v2373, 7
    %v2375 = vsub.s32 %v2372, %v2374
    %v2376 = vrot.slane %v2360, %v2375
    %v2378 = vunpack.c.l.s4 1966171168
    %v2379 = vunpack.c.0.s8 %v2378
    %v2380 = vlaneseq
    %v2381 = vshrl.u32 %v2380, 7
    %v2382 = vsub.s32 %v2379, %v2381
    %v2383 = vrot.slane %v2361, %v2382
    %v2385 = vunpack.c.l.s4 1966171168
    %v2386 = vunpack.c.0.s8 %v2385
    %v2387 = vlaneseq
    %v2388 = vshrl.u32 %v2387, 7
    %v2389 = vsub.s32 %v2386, %v2388
    %v2390 = vrot.slane %v2362, %v2389
    %v2391 = vcombine.low %v2369, %v2376
    %v2392 = vcombine.low %v2383, %v2390
    %v2394 = vunpack.c.l.s4 1966171168
    %v2395 = vunpack.c.0.s8 %v2394
    %v2396 = vlaneseq
    %v2397 = vshrl.u32 %v2396, 7
    %v2398 = vsub.s32 %v2395, %v2397
    %v2399 = vrot.slane %v2391, %v2398
    %v2401 = vunpack.c.l.s4 1966171168
    %v2402 = vunpack.c.0.s8 %v2401
    %v2403 = vlaneseq
    %v2404 = vshrl.u32 %v2403, 7
    %v2405 = vsub.s32 %v2402, %v2404
    %v2406 = vrot.slane %v2392, %v2405
    %v2407 = vcombine.low %v2399, %v2406
    %v2408 = vcombine.low %v1098, %v1102
    %v2409 = vcombine.low %v1106, %v1110
    %v2410 = vcombine.low %v1114, %v1118
    %v2411 = vcombine.low %v1122, %v1126
    %v2413 = vunpack.c.l.s4 1966171168
    %v2414 = vunpack.c.0.s8 %v2413
    %v2415 = vlaneseq
    %v2416 = vshrl.u32 %v2415, 7
    %v2417 = vsub.s32 %v2414, %v2416
    %v2418 = vrot.slane %v2408, %v2417
    %v2420 = vunpack.c.l.s4 1966171168
    %v2421 = vunpack.c.0.s8 %v2420
    %v2422 = vlaneseq
    %v2423 = vshrl.u32 %v2422, 7
    %v2424 = vsub.s32 %v2421, %v2423
    %v2425 = vrot.slane %v2409, %v2424
    %v2427 = vunpack.c.l.s4 1966171168
    %v2428 = vunpack.c.0.s8 %v2427
    %v2429 = vlaneseq
    %v2430 = vshrl.u32 %v2429, 7
    %v2431 = vsub.s32 %v2428, %v2430
    %v2432 = vrot.slane %v2410, %v2431
    %v2434 = vunpack.c.l.s4 1966171168
    %v2435 = vunpack.c.0.s8 %v2434
    %v2436 = vlaneseq
    %v2437 = vshrl.u32 %v2436, 7
    %v2438 = vsub.s32 %v2435, %v2437
    %v2439 = vrot.slane %v2411, %v2438
    %v2440 = vcombine.low %v2418, %v2425
    %v2441 = vcombine.low %v2432, %v2439
    %v2443 = vunpack.c.l.s4 1966171168
    %v2444 = vunpack.c.0.s8 %v2443
    %v2445 = vlaneseq
    %v2446 = vshrl.u32 %v2445, 7
    %v2447 = vsub.s32 %v2444, %v2446
    %v2448 = vrot.slane %v2440, %v2447
    %v2450 = vunpack.c.l.s4 1966171168
    %v2451 = vunpack.c.0.s8 %v2450
    %v2452 = vlaneseq
    %v2453 = vshrl.u32 %v2452, 7
    %v2454 = vsub.s32 %v2451, %v2453
    %v2455 = vrot.slane %v2441, %v2454
    %v2456 = vcombine.low %v2448, %v2455
    %v2457 = vcombine.low %v1130, %v1134
    %v2458 = vcombine.low %v1138, %v1142
    %v2459 = vcombine.low %v1146, %v1150
    %v2460 = vcombine.low %v1154, %v1158
    %v2462 = vunpack.c.l.s4 1966171168
    %v2463 = vunpack.c.0.s8 %v2462
    %v2464 = vlaneseq
    %v2465 = vshrl.u32 %v2464, 7
    %v2466 = vsub.s32 %v2463, %v2465
    %v2467 = vrot.slane %v2457, %v2466
    %v2469 = vunpack.c.l.s4 1966171168
    %v2470 = vunpack.c.0.s8 %v2469
    %v2471 = vlaneseq
    %v2472 = vshrl.u32 %v2471, 7
    %v2473 = vsub.s32 %v2470, %v2472
    %v2474 = vrot.slane %v2458, %v2473
    %v2476 = vunpack.c.l.s4 1966171168
    %v2477 = vunpack.c.0.s8 %v2476
    %v2478 = vlaneseq
    %v2479 = vshrl.u32 %v2478, 7
    %v2480 = vsub.s32 %v2477, %v2479
    %v2481 = vrot.slane %v2459, %v2480
    %v2483 = vunpack.c.l.s4 1966171168
    %v2484 = vunpack.c.0.s8 %v2483
    %v2485 = vlaneseq
    %v2486 = vshrl.u32 %v2485, 7
    %v2487 = vsub.s32 %v2484, %v2486
    %v2488 = vrot.slane %v2460, %v2487
    %v2489 = vcombine.low %v2467, %v2474
    %v2490 = vcombine.low %v2481, %v2488
    %v2492 = vunpack.c.l.s4 1966171168
    %v2493 = vunpack.c.0.s8 %v2492
    %v2494 = vlaneseq
    %v2495 = vshrl.u32 %v2494, 7
    %v2496 = vsub.s32 %v2493, %v2495
    %v2497 = vrot.slane %v2489, %v2496
    %v2499 = vunpack.c.l.s4 1966171168
    %v2500 = vunpack.c.0.s8 %v2499
    %v2501 = vlaneseq
    %v2502 = vshrl.u32 %v2501, 7
    %v2503 = vsub.s32 %v2500, %v2502
    %v2504 = vrot.slane %v2490, %v2503
    %v2505 = vcombine.low %v2497, %v2504
    %v2506 = vcombine.low %v1162, %v1166
    %v2507 = vcombine.low %v1170, %v1174
    %v2508 = vcombine.low %v1178, %v1182
    %v2509 = vcombine.low %v1186, %v1190
    %v2511 = vunpack.c.l.s4 1966171168
    %v2512 = vunpack.c.0.s8 %v2511
    %v2513 = vlaneseq
    %v2514 = vshrl.u32 %v2513, 7
    %v2515 = vsub.s32 %v2512, %v2514
    %v2516 = vrot.slane %v2506, %v2515
    %v2518 = vunpack.c.l.s4 1966171168
    %v2519 = vunpack.c.0.s8 %v2518
    %v2520 = vlaneseq
    %v2521 = vshrl.u32 %v2520, 7
    %v2522 = vsub.s32 %v2519, %v2521
    %v2523 = vrot.slane %v2507, %v2522
    %v2525 = vunpack.c.l.s4 1966171168
    %v2526 = vunpack.c.0.s8 %v2525
    %v2527 = vlaneseq
    %v2528 = vshrl.u32 %v2527, 7
    %v2529 = vsub.s32 %v2526, %v2528
    %v2530 = vrot.slane %v2508, %v2529
    %v2532 = vunpack.c.l.s4 1966171168
    %v2533 = vunpack.c.0.s8 %v2532
    %v2534 = vlaneseq
    %v2535 = vshrl.u32 %v2534, 7
    %v2536 = vsub.s32 %v2533, %v2535
    %v2537 = vrot.slane %v2509, %v2536
    %v2538 = vcombine.low %v2516, %v2523
    %v2539 = vcombine.low %v2530, %v2537
    %v2541 = vunpack.c.l.s4 1966171168
    %v2542 = vunpack.c.0.s8 %v2541
    %v2543 = vlaneseq
    %v2544 = vshrl.u32 %v2543, 7
    %v2545 = vsub.s32 %v2542, %v2544
    %v2546 = vrot.slane %v2538, %v2545
    %v2548 = vunpack.c.l.s4 1966171168
    %v2549 = vunpack.c.0.s8 %v2548
    %v2550 = vlaneseq
    %v2551 = vshrl.u32 %v2550, 7
    %v2552 = vsub.s32 %v2549, %v2551
    %v2553 = vrot.slane %v2539, %v2552
    %v2554 = vcombine.low %v2546, %v2553
    %v2555 = vcombine.low %v1194, %v1198
    %v2556 = vcombine.low %v1202, %v1206
    %v2557 = vcombine.low %v1210, %v1214
    %v2558 = vcombine.low %v1218, %v1222
    %v2560 = vunpack.c.l.s4 1966171168
    %v2561 = vunpack.c.0.s8 %v2560
    %v2562 = vlaneseq
    %v2563 = vshrl.u32 %v2562, 7
    %v2564 = vsub.s32 %v2561, %v2563
    %v2565 = vrot.slane %v2555, %v2564
    %v2567 = vunpack.c.l.s4 1966171168
    %v2568 = vunpack.c.0.s8 %v2567
    %v2569 = vlaneseq
    %v2570 = vshrl.u32 %v2569, 7
    %v2571 = vsub.s32 %v2568, %v2570
    %v2572 = vrot.slane %v2556, %v2571
    %v2574 = vunpack.c.l.s4 1966171168
    %v2575 = vunpack.c.0.s8 %v2574
    %v2576 = vlaneseq
    %v2577 = vshrl.u32 %v2576, 7
    %v2578 = vsub.s32 %v2575, %v2577
    %v2579 = vrot.slane %v2557, %v2578
    %v2581 = vunpack.c.l.s4 1966171168
    %v2582 = vunpack.c.0.s8 %v2581
    %v2583 = vlaneseq
    %v2584 = vshrl.u32 %v2583, 7
    %v2585 = vsub.s32 %v2582, %v2584
    %v2586 = vrot.slane %v2558, %v2585
    %v2587 = vcombine.low %v2565, %v2572
    %v2588 = vcombine.low %v2579, %v2586
    %v2590 = vunpack.c.l.s4 1966171168
    %v2591 = vunpack.c.0.s8 %v2590
    %v2592 = vlaneseq
    %v2593 = vshrl.u32 %v2592, 7
    %v2594 = vsub.s32 %v2591, %v2593
    %v2595 = vrot.slane %v2587, %v2594
    %v2597 = vunpack.c.l.s4 1966171168
    %v2598 = vunpack.c.0.s8 %v2597
    %v2599 = vlaneseq
    %v2600 = vshrl.u32 %v2599, 7
    %v2601 = vsub.s32 %v2598, %v2600
    %v2602 = vrot.slane %v2588, %v2601
    %v2603 = vcombine.low %v2595, %v2602
    %v2604 = vcombine.low %v1226, %v1230
    %v2605 = vcombine.low %v1234, %v1238
    %v2606 = vcombine.low %v1242, %v1246
    %v2607 = vcombine.low %v1250, %v1254
    %v2609 = vunpack.c.l.s4 1966171168
    %v2610 = vunpack.c.0.s8 %v2609
    %v2611 = vlaneseq
    %v2612 = vshrl.u32 %v2611, 7
    %v2613 = vsub.s32 %v2610, %v2612
    %v2614 = vrot.slane %v2604, %v2613
    %v2616 = vunpack.c.l.s4 1966171168
    %v2617 = vunpack.c.0.s8 %v2616
    %v2618 = vlaneseq
    %v2619 = vshrl.u32 %v2618, 7
    %v2620 = vsub.s32 %v2617, %v2619
    %v2621 = vrot.slane %v2605, %v2620
    %v2623 = vunpack.c.l.s4 1966171168
    %v2624 = vunpack.c.0.s8 %v2623
    %v2625 = vlaneseq
    %v2626 = vshrl.u32 %v2625, 7
    %v2627 = vsub.s32 %v2624, %v2626
    %v2628 = vrot.slane %v2606, %v2627
    %v2630 = vunpack.c.l.s4 1966171168
    %v2631 = vunpack.c.0.s8 %v2630
    %v2632 = vlaneseq
    %v2633 = vshrl.u32 %v2632, 7
    %v2634 = vsub.s32 %v2631, %v2633
    %v2635 = vrot.slane %v2607, %v2634
    %v2636 = vcombine.low %v2614, %v2621
    %v2637 = vcombine.low %v2628, %v2635
    %v2639 = vunpack.c.l.s4 1966171168
    %v2640 = vunpack.c.0.s8 %v2639
    %v2641 = vlaneseq
    %v2642 = vshrl.u32 %v2641, 7
    %v2643 = vsub.s32 %v2640, %v2642
    %v2644 = vrot.slane %v2636, %v2643
    %v2646 = vunpack.c.l.s4 1966171168
    %v2647 = vunpack.c.0.s8 %v2646
    %v2648 = vlaneseq
    %v2649 = vshrl.u32 %v2648, 7
    %v2650 = vsub.s32 %v2647, %v2649
    %v2651 = vrot.slane %v2637, %v2650
    %v2652 = vcombine.low %v2644, %v2651
    %v2653 = vcombine.low %v1258, %v1262
    %v2654 = vcombine.low %v1266, %v1270
    %v2655 = vcombine.low %v1274, %v1278
    %v2656 = vcombine.low %v1282, %v1286
    %v2658 = vunpack.c.l.s4 1966171168
    %v2659 = vunpack.c.0.s8 %v2658
    %v2660 = vlaneseq
    %v2661 = vshrl.u32 %v2660, 7
    %v2662 = vsub.s32 %v2659, %v2661
    %v2663 = vrot.slane %v2653, %v2662
    %v2665 = vunpack.c.l.s4 1966171168
    %v2666 = vunpack.c.0.s8 %v2665
    %v2667 = vlaneseq
    %v2668 = vshrl.u32 %v2667, 7
    %v2669 = vsub.s32 %v2666, %v2668
    %v2670 = vrot.slane %v2654, %v2669
    %v2672 = vunpack.c.l.s4 1966171168
    %v2673 = vunpack.c.0.s8 %v2672
    %v2674 = vlaneseq
    %v2675 = vshrl.u32 %v2674, 7
    %v2676 = vsub.s32 %v2673, %v2675
    %v2677 = vrot.slane %v2655, %v2676
    %v2679 = vunpack.c.l.s4 1966171168
    %v2680 = vunpack.c.0.s8 %v2679
    %v2681 = vlaneseq
    %v2682 = vshrl.u32 %v2681, 7
    %v2683 = vsub.s32 %v2680, %v2682
    %v2684 = vrot.slane %v2656, %v2683
    %v2685 = vcombine.low %v2663, %v2670
    %v2686 = vcombine.low %v2677, %v2684
    %v2688 = vunpack.c.l.s4 1966171168
    %v2689 = vunpack.c.0.s8 %v2688
    %v2690 = vlaneseq
    %v2691 = vshrl.u32 %v2690, 7
    %v2692 = vsub.s32 %v2689, %v2691
    %v2693 = vrot.slane %v2685, %v2692
    %v2695 = vunpack.c.l.s4 1966171168
    %v2696 = vunpack.c.0.s8 %v2695
    %v2697 = vlaneseq
    %v2698 = vshrl.u32 %v2697, 7
    %v2699 = vsub.s32 %v2696, %v2698
    %v2700 = vrot.slane %v2686, %v2699
    %v2701 = vcombine.low %v2693, %v2700
    %v2702 = vcombine.low %v1290, %v1294
    %v2703 = vcombine.low %v1298, %v1302
    %v2704 = vcombine.low %v1306, %v1310
    %v2705 = vcombine.low %v1314, %v1318
    %v2707 = vunpack.c.l.s4 1966171168
    %v2708 = vunpack.c.0.s8 %v2707
    %v2709 = vlaneseq
    %v2710 = vshrl.u32 %v2709, 7
    %v2711 = vsub.s32 %v2708, %v2710
    %v2712 = vrot.slane %v2702, %v2711
    %v2714 = vunpack.c.l.s4 1966171168
    %v2715 = vunpack.c.0.s8 %v2714
    %v2716 = vlaneseq
    %v2717 = vshrl.u32 %v2716, 7
    %v2718 = vsub.s32 %v2715, %v2717
    %v2719 = vrot.slane %v2703, %v2718
    %v2721 = vunpack.c.l.s4 1966171168
    %v2722 = vunpack.c.0.s8 %v2721
    %v2723 = vlaneseq
    %v2724 = vshrl.u32 %v2723, 7
    %v2725 = vsub.s32 %v2722, %v2724
    %v2726 = vrot.slane %v2704, %v2725
    %v2728 = vunpack.c.l.s4 1966171168
    %v2729 = vunpack.c.0.s8 %v2728
    %v2730 = vlaneseq
    %v2731 = vshrl.u32 %v2730, 7
    %v2732 = vsub.s32 %v2729, %v2731
    %v2733 = vrot.slane %v2705, %v2732
    %v2734 = vcombine.low %v2712, %v2719
    %v2735 = vcombine.low %v2726, %v2733
    %v2737 = vunpack.c.l.s4 1966171168
    %v2738 = vunpack.c.0.s8 %v2737
    %v2739 = vlaneseq
    %v2740 = vshrl.u32 %v2739, 7
    %v2741 = vsub.s32 %v2738, %v2740
    %v2742 = vrot.slane %v2734, %v2741
    %v2744 = vunpack.c.l.s4 1966171168
    %v2745 = vunpack.c.0.s8 %v2744
    %v2746 = vlaneseq
    %v2747 = vshrl.u32 %v2746, 7
    %v2748 = vsub.s32 %v2745, %v2747
    %v2749 = vrot.slane %v2735, %v2748
    %v2750 = vcombine.low %v2742, %v2749
    %v2751 = vcombine.low %v1322, %v1326
    %v2752 = vcombine.low %v1330, %v1334
    %v2753 = vcombine.low %v1338, %v1342
    %v2754 = vcombine.low %v1346, %v1350
    %v2756 = vunpack.c.l.s4 1966171168
    %v2757 = vunpack.c.0.s8 %v2756
    %v2758 = vlaneseq
    %v2759 = vshrl.u32 %v2758, 7
    %v2760 = vsub.s32 %v2757, %v2759
    %v2761 = vrot.slane %v2751, %v2760
    %v2763 = vunpack.c.l.s4 1966171168
    %v2764 = vunpack.c.0.s8 %v2763
    %v2765 = vlaneseq
    %v2766 = vshrl.u32 %v2765, 7
    %v2767 = vsub.s32 %v2764, %v2766
    %v2768 = vrot.slane %v2752, %v2767
    %v2770 = vunpack.c.l.s4 1966171168
    %v2771 = vunpack.c.0.s8 %v2770
    %v2772 = vlaneseq
    %v2773 = vshrl.u32 %v2772, 7
    %v2774 = vsub.s32 %v2771, %v2773
    %v2775 = vrot.slane %v2753, %v2774
    %v2777 = vunpack.c.l.s4 1966171168
    %v2778 = vunpack.c.0.s8 %v2777
    %v2779 = vlaneseq
    %v2780 = vshrl.u32 %v2779, 7
    %v2781 = vsub.s32 %v2778, %v2780
    %v2782 = vrot.slane %v2754, %v2781
    %v2783 = vcombine.low %v2761, %v2768
    %v2784 = vcombine.low %v2775, %v2782
    %v2786 = vunpack.c.l.s4 1966171168
    %v2787 = vunpack.c.0.s8 %v2786
    %v2788 = vlaneseq
    %v2789 = vshrl.u32 %v2788, 7
    %v2790 = vsub.s32 %v2787, %v2789
    %v2791 = vrot.slane %v2783, %v2790
    %v2793 = vunpack.c.l.s4 1966171168
    %v2794 = vunpack.c.0.s8 %v2793
    %v2795 = vlaneseq
    %v2796 = vshrl.u32 %v2795, 7
    %v2797 = vsub.s32 %v2794, %v2796
    %v2798 = vrot.slane %v2784, %v2797
    %v2799 = vcombine.low %v2791, %v2798
    %v2800 = vcombine.low %v1354, %v1358
    %v2801 = vcombine.low %v1362, %v1366
    %v2802 = vcombine.low %v1370, %v1374
    %v2803 = vcombine.low %v1378, %v1382
    %v2805 = vunpack.c.l.s4 1966171168
    %v2806 = vunpack.c.0.s8 %v2805
    %v2807 = vlaneseq
    %v2808 = vshrl.u32 %v2807, 7
    %v2809 = vsub.s32 %v2806, %v2808
    %v2810 = vrot.slane %v2800, %v2809
    %v2812 = vunpack.c.l.s4 1966171168
    %v2813 = vunpack.c.0.s8 %v2812
    %v2814 = vlaneseq
    %v2815 = vshrl.u32 %v2814, 7
    %v2816 = vsub.s32 %v2813, %v2815
    %v2817 = vrot.slane %v2801, %v2816
    %v2819 = vunpack.c.l.s4 1966171168
    %v2820 = vunpack.c.0.s8 %v2819
    %v2821 = vlaneseq
    %v2822 = vshrl.u32 %v2821, 7
    %v2823 = vsub.s32 %v2820, %v2822
    %v2824 = vrot.slane %v2802, %v2823
    %v2826 = vunpack.c.l.s4 1966171168
    %v2827 = vunpack.c.0.s8 %v2826
    %v2828 = vlaneseq
    %v2829 = vshrl.u32 %v2828, 7
    %v2830 = vsub.s32 %v2827, %v2829
    %v2831 = vrot.slane %v2803, %v2830
    %v2832 = vcombine.low %v2810, %v2817
    %v2833 = vcombine.low %v2824, %v2831
    %v2835 = vunpack.c.l.s4 1966171168
    %v2836 = vunpack.c.0.s8 %v2835
    %v2837 = vlaneseq
    %v2838 = vshrl.u32 %v2837, 7
    %v2839 = vsub.s32 %v2836, %v2838
    %v2840 = vrot.slane %v2832, %v2839
    %v2842 = vunpack.c.l.s4 1966171168
    %v2843 = vunpack.c.0.s8 %v2842
    %v2844 = vlaneseq
    %v2845 = vshrl.u32 %v2844, 7
    %v2846 = vsub.s32 %v2843, %v2845
    %v2847 = vrot.slane %v2833, %v2846
    %v2848 = vcombine.low %v2840, %v2847
    %v2849 = vcombine.low %v1386, %v1390
    %v2850 = vcombine.low %v1394, %v1398
    %v2851 = vcombine.low %v1402, %v1406
    %v2852 = vcombine.low %v1410, %v1414
    %v2854 = vunpack.c.l.s4 1966171168
    %v2855 = vunpack.c.0.s8 %v2854
    %v2856 = vlaneseq
    %v2857 = vshrl.u32 %v2856, 7
    %v2858 = vsub.s32 %v2855, %v2857
    %v2859 = vrot.slane %v2849, %v2858
    %v2861 = vunpack.c.l.s4 1966171168
    %v2862 = vunpack.c.0.s8 %v2861
    %v2863 = vlaneseq
    %v2864 = vshrl.u32 %v2863, 7
    %v2865 = vsub.s32 %v2862, %v2864
    %v2866 = vrot.slane %v2850, %v2865
    %v2868 = vunpack.c.l.s4 1966171168
    %v2869 = vunpack.c.0.s8 %v2868
    %v2870 = vlaneseq
    %v2871 = vshrl.u32 %v2870, 7
    %v2872 = vsub.s32 %v2869, %v2871
    %v2873 = vrot.slane %v2851, %v2872
    %v2875 = vunpack.c.l.s4 1966171168
    %v2876 = vunpack.c.0.s8 %v2875
    %v2877 = vlaneseq
    %v2878 = vshrl.u32 %v2877, 7
    %v2879 = vsub.s32 %v2876, %v2878
    %v2880 = vrot.slane %v2852, %v2879
    %v2881 = vcombine.low %v2859, %v2866
    %v2882 = vcombine.low %v2873, %v2880
    %v2884 = vunpack.c.l.s4 1966171168
    %v2885 = vunpack.c.0.s8 %v2884
    %v2886 = vlaneseq
    %v2887 = vshrl.u32 %v2886, 7
    %v2888 = vsub.s32 %v2885, %v2887
    %v2889 = vrot.slane %v2881, %v2888
    %v2891 = vunpack.c.l.s4 1966171168
    %v2892 = vunpack.c.0.s8 %v2891
    %v2893 = vlaneseq
    %v2894 = vshrl.u32 %v2893, 7
    %v2895 = vsub.s32 %v2892, %v2894
    %v2896 = vrot.slane %v2882, %v2895
    %v2897 = vcombine.low %v2889, %v2896
    %v2898 = vcombine.low %v1418, %v1422
    %v2899 = vcombine.low %v1426, %v1430
    %v2900 = vcombine.low %v1434, %v1438
    %v2901 = vcombine.low %v1442, %v1446
    %v2903 = vunpack.c.l.s4 1966171168
    %v2904 = vunpack.c.0.s8 %v2903
    %v2905 = vlaneseq
    %v2906 = vshrl.u32 %v2905, 7
    %v2907 = vsub.s32 %v2904, %v2906
    %v2908 = vrot.slane %v2898, %v2907
    %v2910 = vunpack.c.l.s4 1966171168
    %v2911 = vunpack.c.0.s8 %v2910
    %v2912 = vlaneseq
    %v2913 = vshrl.u32 %v2912, 7
    %v2914 = vsub.s32 %v2911, %v2913
    %v2915 = vrot.slane %v2899, %v2914
    %v2917 = vunpack.c.l.s4 1966171168
    %v2918 = vunpack.c.0.s8 %v2917
    %v2919 = vlaneseq
    %v2920 = vshrl.u32 %v2919, 7
    %v2921 = vsub.s32 %v2918, %v2920
    %v2922 = vrot.slane %v2900, %v2921
    %v2924 = vunpack.c.l.s4 1966171168
    %v2925 = vunpack.c.0.s8 %v2924
    %v2926 = vlaneseq
    %v2927 = vshrl.u32 %v2926, 7
    %v2928 = vsub.s32 %v2925, %v2927
    %v2929 = vrot.slane %v2901, %v2928
    %v2930 = vcombine.low %v2908, %v2915
    %v2931 = vcombine.low %v2922, %v2929
    %v2933 = vunpack.c.l.s4 1966171168
    %v2934 = vunpack.c.0.s8 %v2933
    %v2935 = vlaneseq
    %v2936 = vshrl.u32 %v2935, 7
    %v2937 = vsub.s32 %v2934, %v2936
    %v2938 = vrot.slane %v2930, %v2937
    %v2940 = vunpack.c.l.s4 1966171168
    %v2941 = vunpack.c.0.s8 %v2940
    %v2942 = vlaneseq
    %v2943 = vshrl.u32 %v2942, 7
    %v2944 = vsub.s32 %v2941, %v2943
    %v2945 = vrot.slane %v2931, %v2944
    %v2946 = vcombine.low %v2938, %v2945
    %v2947 = vcombine.low %v1450, %v1454
    %v2948 = vcombine.low %v1458, %v1462
    %v2949 = vcombine.low %v1466, %v1470
    %v2950 = vcombine.low %v1474, %v1478
    %v2952 = vunpack.c.l.s4 1966171168
    %v2953 = vunpack.c.0.s8 %v2952
    %v2954 = vlaneseq
    %v2955 = vshrl.u32 %v2954, 7
    %v2956 = vsub.s32 %v2953, %v2955
    %v2957 = vrot.slane %v2947, %v2956
    %v2959 = vunpack.c.l.s4 1966171168
    %v2960 = vunpack.c.0.s8 %v2959
    %v2961 = vlaneseq
    %v2962 = vshrl.u32 %v2961, 7
    %v2963 = vsub.s32 %v2960, %v2962
    %v2964 = vrot.slane %v2948, %v2963
    %v2966 = vunpack.c.l.s4 1966171168
    %v2967 = vunpack.c.0.s8 %v2966
    %v2968 = vlaneseq
    %v2969 = vshrl.u32 %v2968, 7
    %v2970 = vsub.s32 %v2967, %v2969
    %v2971 = vrot.slane %v2949, %v2970
    %v2973 = vunpack.c.l.s4 1966171168
    %v2974 = vunpack.c.0.s8 %v2973
    %v2975 = vlaneseq
    %v2976 = vshrl.u32 %v2975, 7
    %v2977 = vsub.s32 %v2974, %v2976
    %v2978 = vrot.slane %v2950, %v2977
    %v2979 = vcombine.low %v2957, %v2964
    %v2980 = vcombine.low %v2971, %v2978
    %v2982 = vunpack.c.l.s4 1966171168
    %v2983 = vunpack.c.0.s8 %v2982
    %v2984 = vlaneseq
    %v2985 = vshrl.u32 %v2984, 7
    %v2986 = vsub.s32 %v2983, %v2985
    %v2987 = vrot.slane %v2979, %v2986
    %v2989 = vunpack.c.l.s4 1966171168
    %v2990 = vunpack.c.0.s8 %v2989
    %v2991 = vlaneseq
    %v2992 = vshrl.u32 %v2991, 7
    %v2993 = vsub.s32 %v2990, %v2992
    %v2994 = vrot.slane %v2980, %v2993
    %v2995 = vcombine.low %v2987, %v2994
    %v2996 = vcombine.low %v1482, %v1486
    %v2997 = vcombine.low %v1490, %v1494
    %v2998 = vcombine.low %v1498, %v1502
    %v2999 = vcombine.low %v1506, %v1510
    %v3001 = vunpack.c.l.s4 1966171168
    %v3002 = vunpack.c.0.s8 %v3001
    %v3003 = vlaneseq
    %v3004 = vshrl.u32 %v3003, 7
    %v3005 = vsub.s32 %v3002, %v3004
    %v3006 = vrot.slane %v2996, %v3005
    %v3008 = vunpack.c.l.s4 1966171168
    %v3009 = vunpack.c.0.s8 %v3008
    %v3010 = vlaneseq
    %v3011 = vshrl.u32 %v3010, 7
    %v3012 = vsub.s32 %v3009, %v3011
    %v3013 = vrot.slane %v2997, %v3012
    %v3015 = vunpack.c.l.s4 1966171168
    %v3016 = vunpack.c.0.s8 %v3015
    %v3017 = vlaneseq
    %v3018 = vshrl.u32 %v3017, 7
    %v3019 = vsub.s32 %v3016, %v3018
    %v3020 = vrot.slane %v2998, %v3019
    %v3022 = vunpack.c.l.s4 1966171168
    %v3023 = vunpack.c.0.s8 %v3022
    %v3024 = vlaneseq
    %v3025 = vshrl.u32 %v3024, 7
    %v3026 = vsub.s32 %v3023, %v3025
    %v3027 = vrot.slane %v2999, %v3026
    %v3028 = vcombine.low %v3006, %v3013
    %v3029 = vcombine.low %v3020, %v3027
    %v3031 = vunpack.c.l.s4 1966171168
    %v3032 = vunpack.c.0.s8 %v3031
    %v3033 = vlaneseq
    %v3034 = vshrl.u32 %v3033, 7
    %v3035 = vsub.s32 %v3032, %v3034
    %v3036 = vrot.slane %v3028, %v3035
    %v3038 = vunpack.c.l.s4 1966171168
    %v3039 = vunpack.c.0.s8 %v3038
    %v3040 = vlaneseq
    %v3041 = vshrl.u32 %v3040, 7
    %v3042 = vsub.s32 %v3039, %v3041
    %v3043 = vrot.slane %v3029, %v3042
    %v3044 = vcombine.low %v3036, %v3043
    %v3045 = vcombine.low %v1514, %v1518
    %v3046 = vcombine.low %v1522, %v1526
    %v3047 = vcombine.low %v1530, %v1534
    %v3048 = vcombine.low %v1538, %v1542
    %v3050 = vunpack.c.l.s4 1966171168
    %v3051 = vunpack.c.0.s8 %v3050
    %v3052 = vlaneseq
    %v3053 = vshrl.u32 %v3052, 7
    %v3054 = vsub.s32 %v3051, %v3053
    %v3055 = vrot.slane %v3045, %v3054
    %v3057 = vunpack.c.l.s4 1966171168
    %v3058 = vunpack.c.0.s8 %v3057
    %v3059 = vlaneseq
    %v3060 = vshrl.u32 %v3059, 7
    %v3061 = vsub.s32 %v3058, %v3060
    %v3062 = vrot.slane %v3046, %v3061
    %v3064 = vunpack.c.l.s4 1966171168
    %v3065 = vunpack.c.0.s8 %v3064
    %v3066 = vlaneseq
    %v3067 = vshrl.u32 %v3066, 7
    %v3068 = vsub.s32 %v3065, %v3067
    %v3069 = vrot.slane %v3047, %v3068
    %v3071 = vunpack.c.l.s4 1966171168
    %v3072 = vunpack.c.0.s8 %v3071
    %v3073 = vlaneseq
    %v3074 = vshrl.u32 %v3073, 7
    %v3075 = vsub.s32 %v3072, %v3074
    %v3076 = vrot.slane %v3048, %v3075
    %v3077 = vcombine.low %v3055, %v3062
    %v3078 = vcombine.low %v3069, %v3076
    %v3080 = vunpack.c.l.s4 1966171168
    %v3081 = vunpack.c.0.s8 %v3080
    %v3082 = vlaneseq
    %v3083 = vshrl.u32 %v3082, 7
    %v3084 = vsub.s32 %v3081, %v3083
    %v3085 = vrot.slane %v3077, %v3084
    %v3087 = vunpack.c.l.s4 1966171168
    %v3088 = vunpack.c.0.s8 %v3087
    %v3089 = vlaneseq
    %v3090 = vshrl.u32 %v3089, 7
    %v3091 = vsub.s32 %v3088, %v3090
    %v3092 = vrot.slane %v3078, %v3091
    %v3093 = vcombine.low %v3085, %v3092
    %v3094 = vcombine.low %v1546, %v1550
    %v3095 = vcombine.low %v1554, %v1558
    %v3096 = vcombine.low %v1562, %v1566
    %v3097 = vcombine.low %v1570, %v1574
    %v3099 = vunpack.c.l.s4 1966171168
    %v3100 = vunpack.c.0.s8 %v3099
    %v3101 = vlaneseq
    %v3102 = vshrl.u32 %v3101, 7
    %v3103 = vsub.s32 %v3100, %v3102
    %v3104 = vrot.slane %v3094, %v3103
    %v3106 = vunpack.c.l.s4 1966171168
    %v3107 = vunpack.c.0.s8 %v3106
    %v3108 = vlaneseq
    %v3109 = vshrl.u32 %v3108, 7
    %v3110 = vsub.s32 %v3107, %v3109
    %v3111 = vrot.slane %v3095, %v3110
    %v3113 = vunpack.c.l.s4 1966171168
    %v3114 = vunpack.c.0.s8 %v3113
    %v3115 = vlaneseq
    %v3116 = vshrl.u32 %v3115, 7
    %v3117 = vsub.s32 %v3114, %v3116
    %v3118 = vrot.slane %v3096, %v3117
    %v3120 = vunpack.c.l.s4 1966171168
    %v3121 = vunpack.c.0.s8 %v3120
    %v3122 = vlaneseq
    %v3123 = vshrl.u32 %v3122, 7
    %v3124 = vsub.s32 %v3121, %v3123
    %v3125 = vrot.slane %v3097, %v3124
    %v3126 = vcombine.low %v3104, %v3111
    %v3127 = vcombine.low %v3118, %v3125
    %v3129 = vunpack.c.l.s4 1966171168
    %v3130 = vunpack.c.0.s8 %v3129
    %v3131 = vlaneseq
    %v3132 = vshrl.u32 %v3131, 7
    %v3133 = vsub.s32 %v3130, %v3132
    %v3134 = vrot.slane %v3126, %v3133
    %v3136 = vunpack.c.l.s4 1966171168
    %v3137 = vunpack.c.0.s8 %v3136
    %v3138 = vlaneseq
    %v3139 = vshrl.u32 %v3138, 7
    %v3140 = vsub.s32 %v3137, %v3139
    %v3141 = vrot.slane %v3127, %v3140
    %v3142 = vcombine.low %v3134, %v3141
    %3143 = vset.pattern.permute.xlu0 0
    %3144 = vperm.xlu0 %3143, %v1623
    %v3145 = vpop.permute.xlu0 %3144
    %3146 = vset.pattern.permute.xlu0 0
    %3147 = vperm.xlu0 %3146, %v1672
    %v3148 = vpop.permute.xlu0 %3147
    %3149 = vset.pattern.permute.xlu0 0
    %3150 = vperm.xlu0 %3149, %v1721
    %v3151 = vpop.permute.xlu0 %3150
    %3152 = vset.pattern.permute.xlu0 0
    %3153 = vperm.xlu0 %3152, %v1770
    %v3154 = vpop.permute.xlu0 %3153
    %3155 = vset.pattern.permute.xlu0 0
    %3156 = vperm.xlu0 %3155, %v1819
    %v3157 = vpop.permute.xlu0 %3156
    %3158 = vset.pattern.permute.xlu0 0
    %3159 = vperm.xlu0 %3158, %v1868
    %v3160 = vpop.permute.xlu0 %3159
    %3161 = vset.pattern.permute.xlu0 0
    %3162 = vperm.xlu0 %3161, %v1917
    %v3163 = vpop.permute.xlu0 %3162
    %3164 = vset.pattern.permute.xlu0 0
    %3165 = vperm.xlu0 %3164, %v1966
    %v3166 = vpop.permute.xlu0 %3165
    %3167 = vset.pattern.permute.xlu0 0
    %3168 = vperm.xlu0 %3167, %v2015
    %v3169 = vpop.permute.xlu0 %3168
    %3170 = vset.pattern.permute.xlu0 0
    %3171 = vperm.xlu0 %3170, %v2064
    %v3172 = vpop.permute.xlu0 %3171
    %3173 = vset.pattern.permute.xlu0 0
    %3174 = vperm.xlu0 %3173, %v2113
    %v3175 = vpop.permute.xlu0 %3174
    %3176 = vset.pattern.permute.xlu0 0
    %3177 = vperm.xlu0 %3176, %v2162
    %v3178 = vpop.permute.xlu0 %3177
    %3179 = vset.pattern.permute.xlu0 0
    %3180 = vperm.xlu0 %3179, %v2211
    %v3181 = vpop.permute.xlu0 %3180
    %3182 = vset.pattern.permute.xlu0 0
    %3183 = vperm.xlu0 %3182, %v2260
    %v3184 = vpop.permute.xlu0 %3183
    %3185 = vset.pattern.permute.xlu0 0
    %3186 = vperm.xlu0 %3185, %v2309
    %v3187 = vpop.permute.xlu0 %3186
    %3188 = vset.pattern.permute.xlu0 0
    %3189 = vperm.xlu0 %3188, %v2358
    %v3190 = vpop.permute.xlu0 %3189
    %3191 = vset.pattern.permute.xlu0 0
    %3192 = vperm.xlu0 %3191, %v2407
    %v3193 = vpop.permute.xlu0 %3192
    %3194 = vset.pattern.permute.xlu0 0
    %3195 = vperm.xlu0 %3194, %v2456
    %v3196 = vpop.permute.xlu0 %3195
    %3197 = vset.pattern.permute.xlu0 0
    %3198 = vperm.xlu0 %3197, %v2505
    %v3199 = vpop.permute.xlu0 %3198
    %3200 = vset.pattern.permute.xlu0 0
    %3201 = vperm.xlu0 %3200, %v2554
    %v3202 = vpop.permute.xlu0 %3201
    %3203 = vset.pattern.permute.xlu0 0
    %3204 = vperm.xlu0 %3203, %v2603
    %v3205 = vpop.permute.xlu0 %3204
    %3206 = vset.pattern.permute.xlu0 0
    %3207 = vperm.xlu0 %3206, %v2652
    %v3208 = vpop.permute.xlu0 %3207
    %3209 = vset.pattern.permute.xlu0 0
    %3210 = vperm.xlu0 %3209, %v2701
    %v3211 = vpop.permute.xlu0 %3210
    %3212 = vset.pattern.permute.xlu0 0
    %3213 = vperm.xlu0 %3212, %v2750
    %v3214 = vpop.permute.xlu0 %3213
    %3215 = vset.pattern.permute.xlu0 0
    %3216 = vperm.xlu0 %3215, %v2799
    %v3217 = vpop.permute.xlu0 %3216
    %3218 = vset.pattern.permute.xlu0 0
    %3219 = vperm.xlu0 %3218, %v2848
    %v3220 = vpop.permute.xlu0 %3219
    %3221 = vset.pattern.permute.xlu0 0
    %3222 = vperm.xlu0 %3221, %v2897
    %v3223 = vpop.permute.xlu0 %3222
    %3224 = vset.pattern.permute.xlu0 0
    %3225 = vperm.xlu0 %3224, %v2946
    %v3226 = vpop.permute.xlu0 %3225
    %3227 = vset.pattern.permute.xlu0 0
    %3228 = vperm.xlu0 %3227, %v2995
    %v3229 = vpop.permute.xlu0 %3228
    %3230 = vset.pattern.permute.xlu0 0
    %3231 = vperm.xlu0 %3230, %v3044
    %v3232 = vpop.permute.xlu0 %3231
    %3233 = vset.pattern.permute.xlu0 0
    %3234 = vperm.xlu0 %3233, %v3093
    %v3235 = vpop.permute.xlu0 %3234
    %3236 = vset.pattern.permute.xlu0 0
    %3237 = vperm.xlu0 %3236, %v3142
    %v3238 = vpop.permute.xlu0 %3237
    %v3239 = vlaneseq
    %v3240 = vand.u32 %v3239, 127
    %v3241 = vlaneseq
    %v3242 = vshrl.u32 %v3241, 7
    %v3243 = vsub.s32 %v3240, %v3242
    %v3244 = vrot.slane %v3145, %v3243
    %v3245 = vadd.s32 %v3240, 4294967288
    %v3246 = vlaneseq
    %v3247 = vshrl.u32 %v3246, 7
    %v3248 = vsub.s32 %v3245, %v3247
    %v3249 = vrot.slane %v3148, %v3248
    %vm3250 = vcmask 130112
    %v3251 = vsel %vm3250, %v3249, %v3244
    %v3252 = vadd.s32 %v3240, 4294967280
    %v3253 = vlaneseq
    %v3254 = vshrl.u32 %v3253, 7
    %v3255 = vsub.s32 %v3252, %v3254
    %v3256 = vrot.slane %v3151, %v3255
    %vm3257 = vcmask 195712
    %v3258 = vsel %vm3257, %v3256, %v3251
    %v3259 = vadd.s32 %v3240, 4294967272
    %v3260 = vlaneseq
    %v3261 = vshrl.u32 %v3260, 7
    %v3262 = vsub.s32 %v3259, %v3261
    %v3263 = vrot.slane %v3154, %v3262
    %vm3264 = vcmask 261312
    %v3265 = vsel %vm3264, %v3263, %v3258
    %v3266 = vadd.s32 %v3240, 4294967264
    %v3267 = vlaneseq
    %v3268 = vshrl.u32 %v3267, 7
    %v3269 = vsub.s32 %v3266, %v3268
    %v3270 = vrot.slane %v3157, %v3269
    %vm3271 = vcmask 326912
    %v3272 = vsel %vm3271, %v3270, %v3265
    %v3273 = vadd.s32 %v3240, 4294967256
    %v3274 = vlaneseq
    %v3275 = vshrl.u32 %v3274, 7
    %v3276 = vsub.s32 %v3273, %v3275
    %v3277 = vrot.slane %v3160, %v3276
    %vm3278 = vcmask 392512
    %v3279 = vsel %vm3278, %v3277, %v3272
    %v3280 = vadd.s32 %v3240, 4294967248
    %v3281 = vlaneseq
    %v3282 = vshrl.u32 %v3281, 7
    %v3283 = vsub.s32 %v3280, %v3282
    %v3284 = vrot.slane %v3163, %v3283
    %vm3285 = vcmask 458112
    %v3286 = vsel %vm3285, %v3284, %v3279
    %v3287 = vadd.s32 %v3240, 4294967240
    %v3288 = vlaneseq
    %v3289 = vshrl.u32 %v3288, 7
    %v3290 = vsub.s32 %v3287, %v3289
    %v3291 = vrot.slane %v3166, %v3290
    %vm3292 = vcmask 523712
    %v3293 = vsel %vm3292, %v3291, %v3286
    %v3294 = vadd.s32 %v3240, 4294967232
    %v3295 = vlaneseq
    %v3296 = vshrl.u32 %v3295, 7
    %v3297 = vsub.s32 %v3294, %v3296
    %v3298 = vrot.slane %v3169, %v3297
    %vm3299 = vcmask 589312
    %v3300 = vsel %vm3299, %v3298, %v3293
    %v3301 = vadd.s32 %v3240, 4294967224
    %v3302 = vlaneseq
    %v3303 = vshrl.u32 %v3302, 7
    %v3304 = vsub.s32 %v3301, %v3303
    %v3305 = vrot.slane %v3172, %v3304
    %vm3306 = vcmask 654912
    %v3307 = vsel %vm3306, %v3305, %v3300
    %v3308 = vadd.s32 %v3240, 4294967216
    %v3309 = vlaneseq
    %v3310 = vshrl.u32 %v3309, 7
    %v3311 = vsub.s32 %v3308, %v3310
    %v3312 = vrot.slane %v3175, %v3311
    %vm3313 = vcmask 720512
    %v3314 = vsel %vm3313, %v3312, %v3307
    %v3315 = vadd.s32 %v3240, 4294967208
    %v3316 = vlaneseq
    %v3317 = vshrl.u32 %v3316, 7
    %v3318 = vsub.s32 %v3315, %v3317
    %v3319 = vrot.slane %v3178, %v3318
    %vm3320 = vcmask 786112
    %v3321 = vsel %vm3320, %v3319, %v3314
    %v3322 = vadd.s32 %v3240, 4294967200
    %v3323 = vlaneseq
    %v3324 = vshrl.u32 %v3323, 7
    %v3325 = vsub.s32 %v3322, %v3324
    %v3326 = vrot.slane %v3181, %v3325
    %vm3327 = vcmask 851712
    %v3328 = vsel %vm3327, %v3326, %v3321
    %v3329 = vadd.s32 %v3240, 4294967192
    %v3330 = vlaneseq
    %v3331 = vshrl.u32 %v3330, 7
    %v3332 = vsub.s32 %v3329, %v3331
    %v3333 = vrot.slane %v3184, %v3332
    %vm3334 = vcmask 917312
    %v3335 = vsel %vm3334, %v3333, %v3328
    %v3336 = vadd.s32 %v3240, 4294967184
    %v3337 = vlaneseq
    %v3338 = vshrl.u32 %v3337, 7
    %v3339 = vsub.s32 %v3336, %v3338
    %v3340 = vrot.slane %v3187, %v3339
    %vm3341 = vcmask 982912
    %v3342 = vsel %vm3341, %v3340, %v3335
    %v3343 = vadd.s32 %v3240, 4294967176
    %v3344 = vlaneseq
    %v3345 = vshrl.u32 %v3344, 7
    %v3346 = vsub.s32 %v3343, %v3345
    %v3347 = vrot.slane %v3190, %v3346
    %vm3348 = vcmask 1048512
    %v3349 = vsel %vm3348, %v3347, %v3342
    %v3350 = vlaneseq
    %v3351 = vshrl.u32 %v3350, 7
    %v3352 = vsub.s32 %v3240, %v3351
    %v3353 = vrot.slane %v3193, %v3352
    %v3354 = vlaneseq
    %v3355 = vshrl.u32 %v3354, 7
    %v3356 = vsub.s32 %v3245, %v3355
    %v3357 = vrot.slane %v3196, %v3356
    %v3358 = vsel %vm3250, %v3357, %v3353
    %v3359 = vlaneseq
    %v3360 = vshrl.u32 %v3359, 7
    %v3361 = vsub.s32 %v3252, %v3360
    %v3362 = vrot.slane %v3199, %v3361
    %v3363 = vsel %vm3257, %v3362, %v3358
    %v3364 = vlaneseq
    %v3365 = vshrl.u32 %v3364, 7
    %v3366 = vsub.s32 %v3259, %v3365
    %v3367 = vrot.slane %v3202, %v3366
    %v3368 = vsel %vm3264, %v3367, %v3363
    %v3369 = vlaneseq
    %v3370 = vshrl.u32 %v3369, 7
    %v3371 = vsub.s32 %v3266, %v3370
    %v3372 = vrot.slane %v3205, %v3371
    %v3373 = vsel %vm3271, %v3372, %v3368
    %v3374 = vlaneseq
    %v3375 = vshrl.u32 %v3374, 7
    %v3376 = vsub.s32 %v3273, %v3375
    %v3377 = vrot.slane %v3208, %v3376
    %v3378 = vsel %vm3278, %v3377, %v3373
    %v3379 = vlaneseq
    %v3380 = vshrl.u32 %v3379, 7
    %v3381 = vsub.s32 %v3280, %v3380
    %v3382 = vrot.slane %v3211, %v3381
    %v3383 = vsel %vm3285, %v3382, %v3378
    %v3384 = vlaneseq
    %v3385 = vshrl.u32 %v3384, 7
    %v3386 = vsub.s32 %v3287, %v3385
    %v3387 = vrot.slane %v3214, %v3386
    %v3388 = vsel %vm3292, %v3387, %v3383
    %v3389 = vlaneseq
    %v3390 = vshrl.u32 %v3389, 7
    %v3391 = vsub.s32 %v3294, %v3390
    %v3392 = vrot.slane %v3217, %v3391
    %v3393 = vsel %vm3299, %v3392, %v3388
    %v3394 = vlaneseq
    %v3395 = vshrl.u32 %v3394, 7
    %v3396 = vsub.s32 %v3301, %v3395
    %v3397 = vrot.slane %v3220, %v3396
    %v3398 = vsel %vm3306, %v3397, %v3393
    %v3399 = vlaneseq
    %v3400 = vshrl.u32 %v3399, 7
    %v3401 = vsub.s32 %v3308, %v3400
    %v3402 = vrot.slane %v3223, %v3401
    %v3403 = vsel %vm3313, %v3402, %v3398
    %v3404 = vlaneseq
    %v3405 = vshrl.u32 %v3404, 7
    %v3406 = vsub.s32 %v3315, %v3405
    %v3407 = vrot.slane %v3226, %v3406
    %v3408 = vsel %vm3320, %v3407, %v3403
    %v3409 = vlaneseq
    %v3410 = vshrl.u32 %v3409, 7
    %v3411 = vsub.s32 %v3322, %v3410
    %v3412 = vrot.slane %v3229, %v3411
    %v3413 = vsel %vm3327, %v3412, %v3408
    %v3414 = vlaneseq
    %v3415 = vshrl.u32 %v3414, 7
    %v3416 = vsub.s32 %v3329, %v3415
    %v3417 = vrot.slane %v3232, %v3416
    %v3418 = vsel %vm3334, %v3417, %v3413
    %v3419 = vlaneseq
    %v3420 = vshrl.u32 %v3419, 7
    %v3421 = vsub.s32 %v3336, %v3420
    %v3422 = vrot.slane %v3235, %v3421
    %v3423 = vsel %vm3341, %v3422, %v3418
    %v3424 = vlaneseq
    %v3425 = vshrl.u32 %v3424, 7
    %v3426 = vsub.s32 %v3343, %v3425
    %v3427 = vrot.slane %v3238, %v3426
    %v3428 = vsel %vm3348, %v3427, %v3423
    %v3429 = vcombine.low %v3349, %v3428
    %v3431 = vunpack.c.l.s4 1966171168
    %v3432 = vunpack.c.0.s8 %v3431
    %v3433 = vlaneseq
    %v3434 = vshrl.u32 %v3433, 7
    %v3435 = vsub.s32 %v3432, %v3434
    %v3436 = vrot.slane %v3429, %v3435
    %v3438 = vunpack.c.l.s4 1966171168
    %v3439 = vunpack.c.0.s8 %v3438
    %v3440 = vlaneseq
    %v3441 = vshrl.u32 %v3440, 7
    %v3442 = vsub.s32 %v3439, %v3441
    %v3443 = vrot.slane %v3436, %v3442
    %v3445 = vlaneseq
    %vm3446 = vcmp.ge.s32.totalorder %v3445, 0
    %vm3447 = vcmp.lt.s32.totalorder %v3445, 256
    %vm3448 = vmand %vm3446, %vm3447
    %3449 = vst.msk [vmem:[#allocation8] sm:$0x3] %vm3448, %v3443
    // Predicated region
    $region76: #{tpu_custom_call.1} parent=1 // pred_check
      _
    $region77: #{tpu_custom_call.1} parent=1 // pred_check_branch
      %3451 = sbr.rel (0) target = $region79
    $region78: #{tpu_custom_call.1} parent=1 // pred_region
      %s3453 = ssub.s32 32, 32
      %3454 = vsyncadd [#allocation9], %s3453
      %s3456 = sshll.u32 [#allocation8], 4
      %s3457 = int_to_ptr.vmem [resolvable:$true] %s3456
      %3459 = dma.vmem_to_hbm [thread:$0]  %s3457, 32, %s4, [#allocation9]
    $region79: #{tpu_custom_call.1} parent=1 // pred_fallthru
      _
    // Predicated region
    $region80: #{tpu_custom_call.1} parent=1 // pred_check
      _
    $region81: #{tpu_custom_call.1} parent=1 // pred_check_branch
      %3461 = sbr.rel (0) target = $region83
    $region82: #{tpu_custom_call.1} parent=1 // pred_region
      %3462 = dma.done [#allocation9], 32
    $region83: #{tpu_custom_call.1} parent=1 // pred_fallthru
      _
    %3463 = vsyncpa [#allocation9], 1
  %3464 = vsyncmov [#allocation4]
  %s3465 = vpop.sfrf %3464
  %p3466 = scmp.eq.s32.totalorder %s3465, 0
  %p3467 = pneg %p3466
  %3469 = shalt.err (%p3467)
  %s3470 = scalar_lea.sflag [#allocation4], 1
  %3471 = vsyncmov %s3470
  %s3472 = vpop.sfrf %3471
  %p3473 = scmp.eq.s32.totalorder %s3472, 0
  %p3474 = pneg %p3473
  %3476 = shalt.err (%p3474)

</llo_original>
